<compile_context>
chip_gen: v7x
topology: tpu7x:2x2x1
jax: 0.10.0
libtpu: 0.0.40
codegen_flags: <defaults>
</compile_context>

<pallas_src>
import functools
import math

import jax
import jax.numpy as jnp
from jax import lax
from jax.experimental import pallas as pl
from jax.experimental.pallas import tpu as pltpu  # noqa: F401


# ---------------------------------------------------------------------------
# Packed-parameter blob layout (f32, [PARAM_ROWS, PARAM_LANES])
# Every block starts at an 8-aligned row so all in-kernel slices are cheap.
# ---------------------------------------------------------------------------
PARAM_LANES = 16
ROW_W = 0       # rows 0:F        lanes [0:hd]=W1_stacked,  [hd:2hd]=W2_stacked
ROW_AL = 16     # rows 16:16+hd   lanes [0:H]=a1_left,      [H:2H]=a2_left (block-diag)
ROW_AR = 24     # rows 24:24+H    lanes [0:hd]=a1_right^T,  [hd:2hd]=a2_right^T
ROW_GC1W = 32   # rows 32:32+hd   lanes 0:16  gcn1_w  [hd, 16]
ROW_GO1W = 40   # rows 40:40+hd   lanes 0:16  gon1_w  [hd, 16]
ROW_B = 48      # row 48 gcn1_b[16]; 49 gon1_b[16]; 50 gcn2_b[0:c]; 51 gon2_b[0:c]
ROW_GC2W = 56   # rows 56:72      lanes [0:c]=gcn2_w [16,c], [c:2c]=gon2_w [16,c]
PARAM_ROWS = 72


# ---------------------------------------------------------------------------
# Single fused kernel: GAT heads (both branches) + both GraphConvolution stacks
# ---------------------------------------------------------------------------
def gcn_fused_kernel(x_ref, uv_ref, adj_ref, p_ref, out_ref, *,
                     n_heads, d, c, alpha):
    """Whole forward pass for batch element 0 in one kernel body.

    x_ref   : [N, F]   node_input[0]
    uv_ref  : [N, F]   uv_filed[0]
    adj_ref : [N, N]   adj[0]
    p_ref   : [72, 16] packed parameter blob (layout above)
    out_ref : [N, 2*c] [log_softmax(Y) | leaky_relu(O)] packed on the lane axis
    """
    adj = adj_ref[...]                                                  # [N, N]
    hd = n_heads * d

    def branch(x, br):
        """concat_h(elu(head_h)) @ W1  ==  sum_h elu(head_h) @ W1[h-block]."""
        f = x.shape[1]
        w_stk = p_ref[ROW_W:ROW_W + f, br * hd:(br + 1) * hd]           # [F, hd]
        a_left = p_ref[ROW_AL:ROW_AL + hd,
                       br * n_heads:(br + 1) * n_heads]                 # [hd, H]
        a_rightT = p_ref[ROW_AR:ROW_AR + n_heads,
                         br * hd:(br + 1) * hd]                         # [H, hd]
        gw_row = ROW_GC1W if br == 0 else ROW_GO1W
        gw = p_ref[gw_row:gw_row + hd, :]                               # [hd, 16]

        # all heads projected in one matmul
        h_all = jnp.dot(x, w_stk, preferred_element_type=jnp.float32)   # [N, hd]
        # e1 columns for all heads (block-diagonal attention vectors)
        e1 = jnp.dot(h_all, a_left, preferred_element_type=jnp.float32)  # [N, H]
        # e2 rows for all heads, produced directly in row orientation (no transpose)
        e2 = lax.dot_general(a_rightT, h_all,
                             dimension_numbers=(((1,), (1,)), ((), ())),
                             preferred_element_type=jnp.float32)         # [H, N]

        acc = None
        for h in range(n_heads):                                         # static unroll
            # score[i, j] = leakyrelu(h_i . a[:d] + h_j . a[d:])
            s = e1[:, h:h + 1] + e2[h:h + 1, :]                          # [N, N]
            s = jnp.where(s > 0, s, alpha * s)                           # LeakyReLU(alpha)
            # scores = where(adj == 1, s, 0); attention = where(adj > 0, scores, -30)
            logits = jnp.where(adj > 0.0, jnp.where(adj == 1.0, s, 0.0), -30.0)
            # softmax over dim=2 (axis 1 of the [N, N] tile) -- exact division
            m = jnp.max(logits, axis=1, keepdims=True)
            p = jnp.exp(logits - m)
            attn = p / jnp.sum(p, axis=1, keepdims=True)
            # h_prime[j, k] = sum_i attn[i, j] * h[i, k]  (torch unsqueeze/sum(dim=1))
            h_h = h_all[:, h * d:(h + 1) * d]                            # [N, d]
            hp = lax.dot_general(attn, h_h,
                                 dimension_numbers=(((0,), (0,)), ((), ())),
                                 preferred_element_type=jnp.float32)     # [N, d]
            hp = jnp.where(hp > 0, hp, jnp.exp(hp) - 1.0)                # ELU (concat=True)
            # head-concat fused into the first GraphConvolution matmul
            contrib = jnp.dot(hp, gw[h * d:(h + 1) * d, :],
                              preferred_element_type=jnp.float32)        # [N, 16]
            acc = contrib if acc is None else acc + contrib
        return acc

    def gc_tail(t, b1, w2, b2):
        # relu(adj @ (feat @ W1) + b1) -> adj @ (. @ W2) + b2
        y = jnp.maximum(jnp.dot(adj, t, preferred_element_type=jnp.float32) + b1, 0.0)
        y = jnp.dot(y, w2, preferred_element_type=jnp.float32)
        return jnp.dot(adj, y, preferred_element_type=jnp.float32) + b2

    t_y = branch(x_ref[...], 0)                                          # h_cat @ gcn1_w
    t_o = branch(uv_ref[...], 1)                                         # o_cat @ gon1_w

    y = gc_tail(t_y,
                p_ref[ROW_B + 0:ROW_B + 1, :],                           # gcn1_b
                p_ref[ROW_GC2W:ROW_GC2W + 16, 0:c],                      # gcn2_w
                p_ref[ROW_B + 2:ROW_B + 3, 0:c])                         # gcn2_b
    o = gc_tail(t_o,
                p_ref[ROW_B + 1:ROW_B + 2, :],                           # gon1_b
                p_ref[ROW_GC2W:ROW_GC2W + 16, c:2 * c],                  # gon2_w
                p_ref[ROW_B + 3:ROW_B + 4, 0:c])                         # gon2_b

    # final nonlinearities
    m = jnp.max(y, axis=1, keepdims=True)
    y = y - (m + jnp.log(jnp.sum(jnp.exp(y - m), axis=1, keepdims=True)))  # log_softmax
    o = jnp.where(o > 0, o, 0.01 * o)                                      # nn.LeakyReLU

    # [Y | O] packed on the lane axis of a single output (two narrow stores;
    # cheaper than the old selection-matmul pack which added 2 MXU ops)
    out_ref[:, 0:c] = y.astype(out_ref.dtype)
    out_ref[:, c:2 * c] = o.astype(out_ref.dtype)


# ---------------------------------------------------------------------------
# Host-side parameter packing (done once, outside the jitted forward)
# ---------------------------------------------------------------------------
def pack_params(params):
    H, F1, d0 = params["W1"].shape
    H2, F2, d1 = params["W2"].shape
    assert H == H2 and d0 == d1 and F1 == F2
    hd = H * d0
    g1 = params["gcn1_w"].shape[1]
    c = params["gcn2_w"].shape[1]
    assert g1 == PARAM_LANES and 2 * hd <= PARAM_LANES and 4 * H <= PARAM_LANES
    assert F1 <= ROW_AL - ROW_W and hd <= 8 and params["gcn2_w"].shape[0] == g1

    def attn_blocks(a):
        # block-diagonal "left" [hd, H] and pre-transposed "right" [H, hd]
        left = jnp.zeros((hd, H), jnp.float32)
        rightT = jnp.zeros((H, hd), jnp.float32)
        for h in range(H):
            left = left.at[h * d0:(h + 1) * d0, h].set(a[h, :d0, 0])
            rightT = rightT.at[h, h * d0:(h + 1) * d0].set(a[h, d0:, 0])
        return left, rightT

    blob = jnp.zeros((PARAM_ROWS, PARAM_LANES), jnp.float32)
    w1s = jnp.transpose(params["W1"], (1, 0, 2)).reshape(F1, hd)
    w2s = jnp.transpose(params["W2"], (1, 0, 2)).reshape(F2, hd)
    blob = blob.at[ROW_W:ROW_W + F1, 0:hd].set(w1s)
    blob = blob.at[ROW_W:ROW_W + F2, hd:2 * hd].set(w2s)

    l1, r1t = attn_blocks(params["a1"])
    l2, r2t = attn_blocks(params["a2"])
    blob = blob.at[ROW_AL:ROW_AL + hd, 0:H].set(l1)
    blob = blob.at[ROW_AL:ROW_AL + hd, H:2 * H].set(l2)
    blob = blob.at[ROW_AR:ROW_AR + H, 0:hd].set(r1t)
    blob = blob.at[ROW_AR:ROW_AR + H, hd:2 * hd].set(r2t)

    blob = blob.at[ROW_GC1W:ROW_GC1W + hd, 0:g1].set(params["gcn1_w"])
    blob = blob.at[ROW_GO1W:ROW_GO1W + hd, 0:g1].set(params["gon1_w"])
    blob = blob.at[ROW_B + 0, 0:g1].set(params["gcn1_b"])
    blob = blob.at[ROW_B + 1, 0:g1].set(params["gon1_b"])
    blob = blob.at[ROW_B + 2, 0:c].set(params["gcn2_b"])
    blob = blob.at[ROW_B + 3, 0:c].set(params["gon2_b"])
    blob = blob.at[ROW_GC2W:ROW_GC2W + g1, 0:c].set(params["gcn2_w"])
    blob = blob.at[ROW_GC2W:ROW_GC2W + g1, c:2 * c].set(params["gon2_w"])
    return blob, dict(n_heads=H, d=d0, c=c)


# ---------------------------------------------------------------------------
# Wrapper: one pallas_call for the whole forward
# ---------------------------------------------------------------------------
def gcn_forward(param_blob, node_input, uv_filed, adj, *, n_heads, d, c, alpha):
    """Returns (log_softmax(Y), leaky_relu(O)) exactly like the torch module."""
    N, F = node_input.shape[1], node_input.shape[2]
    hd = n_heads * d
    kernel = functools.partial(gcn_fused_kernel,
                               n_heads=n_heads, d=d, c=c, alpha=alpha)
    flops = 4 * N * (F * hd + hd * 2 * n_heads
                     + n_heads * (N * d + d * 16)
                     + N * 16 + 16 * c + N * c)
    cost = pl.CostEstimate(
        flops=int(flops),
        transcendentals=int(2 * (n_heads * N * N + n_heads * N * d + N * c)),
        bytes_accessed=int(4 * (2 * N * F + N * N
                                + PARAM_ROWS * PARAM_LANES + N * 2 * c)))
    packed = pl.pallas_call(
        kernel,
        out_shape=jax.ShapeDtypeStruct((N, 2 * c), jnp.float32),
        cost_estimate=cost,
    )(node_input[0], uv_filed[0], adj[0], param_blob)
    return packed[:, :c], packed[:, c:]


# ---------------------------------------------------------------------------
# Pure-JAX reference (mirrors the torch module; used for a correctness check)
# ---------------------------------------------------------------------------
def gcn_forward_ref(params, node_input, uv_filed, adj, alpha):
    with jax.default_matmul_precision("highest"):
        def gat_heads(x, W, a):
            H, _, d = W.shape
            outs = []
            for hh in range(H):
                h = jnp.einsum("bnf,fd->bnd", x, W[hh])
                e1 = jnp.einsum("bnd,dk->bnk", h, a[hh, :d])
                e2 = jnp.einsum("bnd,dk->bnk", h, a[hh, d:])
                s = e1 + jnp.swapaxes(e2, 1, 2)
                s = jnp.where(s > 0, s, alpha * s)
                logits = jnp.where(adj > 0.0, jnp.where(adj == 1.0, s, 0.0), -30.0)
                attn = jax.nn.softmax(logits, axis=2)
                hp = jnp.einsum("bij,bik->bjk", attn, h)
                outs.append(jax.nn.elu(hp))
            return jnp.concatenate(outs, axis=-1)

        h = gat_heads(node_input, params["W1"], params["a1"])[0]
        o = gat_heads(uv_filed, params["W2"], params["a2"])[0]
        a0 = adj[0]
        Y = jax.nn.relu(a0 @ (h @ params["gcn1_w"]) + params["gcn1_b"])
        Y = a0 @ (Y @ params["gcn2_w"]) + params["gcn2_b"]
        O = jax.nn.relu(a0 @ (o @ params["gon1_w"]) + params["gon1_b"])
        O = a0 @ (O @ params["gon2_w"]) + params["gon2_b"]
        return jax.nn.log_softmax(Y, axis=1), jnp.where(O > 0, O, 0.01 * O)


# ---------------------------------------------------------------------------
# Deterministic parameter init (shapes match the torch module's __init__)
# ---------------------------------------------------------------------------
def xavier_uniform(key, shape, gain=1.414):
    fan_in, fan_out = shape[-2], shape[-1]
    bound = gain * math.sqrt(6.0 / (fan_in + fan_out))
    return jax.random.uniform(key, shape, jnp.float32, -bound, bound)


def kaiming_uniform(key, shape):
    fan_in = shape[1]
    bound = math.sqrt(2.0) * math.sqrt(3.0 / fan_in)
    return jax.random.uniform(key, shape, jnp.float32, -bound, bound)


def init_params(key, in_dim, hid_dim, n_heads):
    d0 = hid_dim[0] // n_heads
    d1 = hid_dim[1] // n_heads
    ks = jax.random.split(key, 10)
    # in_dim == [9, 9] branch of the torch module -> GraphConvolution(8,16),(16,2)
    return {
        "W1": xavier_uniform(ks[0], (n_heads, in_dim[0], d0)),
        "a1": xavier_uniform(ks[1], (n_heads, 2 * d0, 1)),
        "W2": xavier_uniform(ks[2], (n_heads, in_dim[1], d1)),
        "a2": xavier_uniform(ks[3], (n_heads, 2 * d1, 1)),
        "gcn1_w": kaiming_uniform(ks[4], (hid_dim[0], 16)),
        "gcn1_b": jnp.zeros((16,), jnp.float32),
        "gcn2_w": kaiming_uniform(ks[5], (16, 2)),
        "gcn2_b": jnp.zeros((2,), jnp.float32),
        "gon1_w": kaiming_uniform(ks[6], (hid_dim[1], 16)),
        "gon1_b": jnp.zeros((16,), jnp.float32),
        "gon2_w": kaiming_uniform(ks[7], (16, 2)),
        "gon2_b": jnp.zeros((2,), jnp.float32),
    }


if __name__ == "__main__":
    # Config matching the torch module's in_dim == [9, 9] branch:
    # GraphConvolution(8, 16) requires hid_dim[0] == 8 (2 heads of width 4).
    in_dim = [9, 9]
    hid_dim = [8, 8]
    n_heads = 2
    alpha = 0.2

    B, N = 2, 8
    key = jax.random.PRNGKey(0)
    k_par, k_x, k_uv, k_adj = jax.random.split(key, 4)

    params = init_params(k_par, in_dim, hid_dim, n_heads)
    node_input = jax.random.normal(k_x, (B, N, in_dim[0]), jnp.float32)
    uv_filed = jax.random.normal(k_uv, (B, N, in_dim[1]), jnp.float32)
    # adjacency in {0, 1} with self-loops (matches adj==1 / adj>0 semantics)
    adj = jax.random.bernoulli(k_adj, 0.5, (B, N, N)).astype(jnp.float32)
    adj = jnp.maximum(adj, jnp.eye(N, dtype=jnp.float32)[None, :, :])

    # pack the 12 tiny parameter tensors into one blob (one DMA) outside the jit
    param_blob, meta = pack_params(params)

    fwd = jax.jit(functools.partial(gcn_forward, alpha=alpha, **meta))
    Y, O = fwd(param_blob, node_input, uv_filed, adj)
    jax.block_until_ready((Y, O))

    assert Y.shape == (N, 2) and O.shape == (N, 2)

    # correctness check vs. pure-JAX (highest-precision) reference
    Y_ref, O_ref = gcn_forward_ref(params, node_input, uv_filed, adj, alpha)
    err = max(float(jnp.max(jnp.abs(Y - Y_ref))), float(jnp.max(jnp.abs(O - O_ref))))
    assert err < 1e-2, f"mismatch vs reference: {err}"

    print("KERNEL_OK")
</pallas_src>

<mosaic_0001>
module attributes {stable_mosaic.version = 11 : i64} {
  func.func @gcn_fused_kernel(%arg0: memref<8x9xf32, #tpu.memory_space<vmem>>, %arg1: memref<8x9xf32, #tpu.memory_space<vmem>>, %arg2: memref<8x8xf32, #tpu.memory_space<vmem>>, %arg3: memref<72x16xf32, #tpu.memory_space<vmem>>, %arg4: memref<8x4xf32, #tpu.memory_space<vmem>>) attributes {dimension_semantics = [], scalar_prefetch = 0 : i64, scratch_operands = 0 : i64, tpu.core_type = #tpu.core_type<tc>} {
    %c0 = arith.constant 0 : index
    %c0_0 = arith.constant 0 : index
    %0 = vector.load %arg2[%c0, %c0_0] : memref<8x8xf32, #tpu.memory_space<vmem>>, vector<8x8xf32>
    %c0_1 = arith.constant 0 : index
    %c0_2 = arith.constant 0 : index
    %1 = vector.load %arg0[%c0_1, %c0_2] : memref<8x9xf32, #tpu.memory_space<vmem>>, vector<8x9xf32>
    %c0_3 = arith.constant 0 : index
    %c0_4 = arith.constant 0 : index
    %2 = vector.load %arg3[%c0_3, %c0_4] : memref<72x16xf32, #tpu.memory_space<vmem>>, vector<9x8xf32>
    %c16 = arith.constant 16 : index
    %c0_5 = arith.constant 0 : index
    %3 = vector.load %arg3[%c16, %c0_5] : memref<72x16xf32, #tpu.memory_space<vmem>>, vector<8x2xf32>
    %c24 = arith.constant 24 : index
    %c0_6 = arith.constant 0 : index
    %4 = vector.load %arg3[%c24, %c0_6] : memref<72x16xf32, #tpu.memory_space<vmem>>, vector<2x8xf32>
    %c32 = arith.constant 32 : index
    %c0_7 = arith.constant 0 : index
    %5 = vector.load %arg3[%c32, %c0_7] : memref<72x16xf32, #tpu.memory_space<vmem>>, vector<8x16xf32>
    %cst = arith.constant dense<0.000000e+00> : vector<8x8xf32>
    %6 = tpu.matmul %1, %2, %cst {dimension_numbers = #tpu.dot_dimension_numbers<[1], [0], [0], [1], [0, 0, 1, 1], [], []>} : vector<8x9xf32>, vector<9x8xf32>, vector<8x8xf32> -> vector<8x8xf32>
    %cst_8 = arith.constant dense<0.000000e+00> : vector<8x2xf32>
    %7 = tpu.matmul %6, %3, %cst_8 {dimension_numbers = #tpu.dot_dimension_numbers<[1], [0], [0], [1], [0, 0, 1, 1], [], []>} : vector<8x8xf32>, vector<8x2xf32>, vector<8x2xf32> -> vector<8x2xf32>
    %cst_9 = arith.constant dense<0.000000e+00> : vector<2x8xf32>
    %8 = tpu.matmul %4, %6, %cst_9 {dimension_numbers = #tpu.dot_dimension_numbers<[1], [1], [0], [0], [0, 0, 1, 0], [], []>} : vector<2x8xf32>, vector<8x8xf32>, vector<2x8xf32> -> vector<2x8xf32>
    %9 = vector.extract_strided_slice %7 {offsets = [0, 0], sizes = [8, 1], strides = [1, 1]} : vector<8x2xf32> to vector<8x1xf32>
    %10 = vector.extract_strided_slice %8 {offsets = [0, 0], sizes = [1, 8], strides = [1, 1]} : vector<2x8xf32> to vector<1x8xf32>
    %11 = vector.broadcast %9 : vector<8x1xf32> to vector<8x8xf32>
    %12 = vector.broadcast %10 : vector<1x8xf32> to vector<8x8xf32>
    %13 = arith.addf %11, %12 : vector<8x8xf32>
    %cst_10 = arith.constant 0.000000e+00 : f32
    %14 = vector.broadcast %cst_10 : f32 to vector<8x8xf32>
    %15 = arith.cmpf ogt, %13, %14 : vector<8x8xf32>
    %cst_11 = arith.constant 2.000000e-01 : f32
    %16 = vector.broadcast %cst_11 : f32 to vector<8x8xf32>
    %17 = arith.mulf %16, %13 : vector<8x8xf32>
    %18 = arith.select %15, %13, %17 : vector<8x8xi1>, vector<8x8xf32>
    %cst_12 = arith.constant 0.000000e+00 : f32
    %19 = vector.broadcast %cst_12 : f32 to vector<8x8xf32>
    %20 = arith.cmpf ogt, %0, %19 : vector<8x8xf32>
    %cst_13 = arith.constant 1.000000e+00 : f32
    %21 = vector.broadcast %cst_13 : f32 to vector<8x8xf32>
    %22 = arith.cmpf oeq, %0, %21 : vector<8x8xf32>
    %cst_14 = arith.constant 0.000000e+00 : f32
    %23 = vector.broadcast %cst_14 : f32 to vector<8x8xf32>
    %24 = arith.select %22, %18, %23 : vector<8x8xi1>, vector<8x8xf32>
    %cst_15 = arith.constant -3.000000e+01 : f32
    %25 = vector.broadcast %cst_15 : f32 to vector<8x8xf32>
    %26 = arith.select %20, %24, %25 : vector<8x8xi1>, vector<8x8xf32>
    %cst_16 = arith.constant dense<0xFF800000> : vector<8xf32>
    %27 = vector.multi_reduction <maximumf>, %26, %cst_16 [1] : vector<8x8xf32> to vector<8xf32>
    %28 = vector.shape_cast %27 : vector<8xf32> to vector<8x1xf32>
    %29 = vector.broadcast %28 : vector<8x1xf32> to vector<8x8xf32>
    %30 = arith.subf %26, %29 : vector<8x8xf32>
    %31 = math.exp %30 : vector<8x8xf32>
    %cst_17 = arith.constant dense<0.000000e+00> : vector<8xf32>
    %32 = vector.multi_reduction <add>, %31, %cst_17 [1] : vector<8x8xf32> to vector<8xf32>
    %33 = vector.shape_cast %32 : vector<8xf32> to vector<8x1xf32>
    %34 = vector.broadcast %33 : vector<8x1xf32> to vector<8x8xf32>
    %35 = arith.divf %31, %34 : vector<8x8xf32>
    %36 = vector.extract_strided_slice %6 {offsets = [0, 0], sizes = [8, 4], strides = [1, 1]} : vector<8x8xf32> to vector<8x4xf32>
    %cst_18 = arith.constant dense<0.000000e+00> : vector<8x4xf32>
    %37 = tpu.matmul %35, %36, %cst_18 {dimension_numbers = #tpu.dot_dimension_numbers<[0], [0], [1], [1], [0, 1, 1, 1], [], []>} : vector<8x8xf32>, vector<8x4xf32>, vector<8x4xf32> -> vector<8x4xf32>
    %cst_19 = arith.constant 0.000000e+00 : f32
    %38 = vector.broadcast %cst_19 : f32 to vector<8x4xf32>
    %39 = arith.cmpf ogt, %37, %38 : vector<8x4xf32>
    %40 = math.exp %37 : vector<8x4xf32>
    %cst_20 = arith.constant 1.000000e+00 : f32
    %41 = vector.broadcast %cst_20 : f32 to vector<8x4xf32>
    %42 = arith.subf %40, %41 : vector<8x4xf32>
    %43 = arith.select %39, %37, %42 : vector<8x4xi1>, vector<8x4xf32>
    %44 = vector.extract_strided_slice %5 {offsets = [0, 0], sizes = [4, 16], strides = [1, 1]} : vector<8x16xf32> to vector<4x16xf32>
    %cst_21 = arith.constant dense<0.000000e+00> : vector<8x16xf32>
    %45 = tpu.matmul %43, %44, %cst_21 {dimension_numbers = #tpu.dot_dimension_numbers<[1], [0], [0], [1], [0, 0, 1, 1], [], []>} : vector<8x4xf32>, vector<4x16xf32>, vector<8x16xf32> -> vector<8x16xf32>
    %46 = vector.extract_strided_slice %7 {offsets = [0, 1], sizes = [8, 1], strides = [1, 1]} : vector<8x2xf32> to vector<8x1xf32>
    %47 = vector.extract_strided_slice %8 {offsets = [1, 0], sizes = [1, 8], strides = [1, 1]} : vector<2x8xf32> to vector<1x8xf32>
    %48 = vector.broadcast %46 : vector<8x1xf32> to vector<8x8xf32>
    %49 = vector.broadcast %47 : vector<1x8xf32> to vector<8x8xf32>
    %50 = arith.addf %48, %49 : vector<8x8xf32>
    %cst_22 = arith.constant 0.000000e+00 : f32
    %51 = vector.broadcast %cst_22 : f32 to vector<8x8xf32>
    %52 = arith.cmpf ogt, %50, %51 : vector<8x8xf32>
    %cst_23 = arith.constant 2.000000e-01 : f32
    %53 = vector.broadcast %cst_23 : f32 to vector<8x8xf32>
    %54 = arith.mulf %53, %50 : vector<8x8xf32>
    %55 = arith.select %52, %50, %54 : vector<8x8xi1>, vector<8x8xf32>
    %cst_24 = arith.constant 0.000000e+00 : f32
    %56 = vector.broadcast %cst_24 : f32 to vector<8x8xf32>
    %57 = arith.cmpf ogt, %0, %56 : vector<8x8xf32>
    %cst_25 = arith.constant 1.000000e+00 : f32
    %58 = vector.broadcast %cst_25 : f32 to vector<8x8xf32>
    %59 = arith.cmpf oeq, %0, %58 : vector<8x8xf32>
    %cst_26 = arith.constant 0.000000e+00 : f32
    %60 = vector.broadcast %cst_26 : f32 to vector<8x8xf32>
    %61 = arith.select %59, %55, %60 : vector<8x8xi1>, vector<8x8xf32>
    %cst_27 = arith.constant -3.000000e+01 : f32
    %62 = vector.broadcast %cst_27 : f32 to vector<8x8xf32>
    %63 = arith.select %57, %61, %62 : vector<8x8xi1>, vector<8x8xf32>
    %cst_28 = arith.constant dense<0xFF800000> : vector<8xf32>
    %64 = vector.multi_reduction <maximumf>, %63, %cst_28 [1] : vector<8x8xf32> to vector<8xf32>
    %65 = vector.shape_cast %64 : vector<8xf32> to vector<8x1xf32>
    %66 = vector.broadcast %65 : vector<8x1xf32> to vector<8x8xf32>
    %67 = arith.subf %63, %66 : vector<8x8xf32>
    %68 = math.exp %67 : vector<8x8xf32>
    %cst_29 = arith.constant dense<0.000000e+00> : vector<8xf32>
    %69 = vector.multi_reduction <add>, %68, %cst_29 [1] : vector<8x8xf32> to vector<8xf32>
    %70 = vector.shape_cast %69 : vector<8xf32> to vector<8x1xf32>
    %71 = vector.broadcast %70 : vector<8x1xf32> to vector<8x8xf32>
    %72 = arith.divf %68, %71 : vector<8x8xf32>
    %73 = vector.extract_strided_slice %6 {offsets = [0, 4], sizes = [8, 4], strides = [1, 1]} : vector<8x8xf32> to vector<8x4xf32>
    %cst_30 = arith.constant dense<0.000000e+00> : vector<8x4xf32>
    %74 = tpu.matmul %72, %73, %cst_30 {dimension_numbers = #tpu.dot_dimension_numbers<[0], [0], [1], [1], [0, 1, 1, 1], [], []>} : vector<8x8xf32>, vector<8x4xf32>, vector<8x4xf32> -> vector<8x4xf32>
    %cst_31 = arith.constant 0.000000e+00 : f32
    %75 = vector.broadcast %cst_31 : f32 to vector<8x4xf32>
    %76 = arith.cmpf ogt, %74, %75 : vector<8x4xf32>
    %77 = math.exp %74 : vector<8x4xf32>
    %cst_32 = arith.constant 1.000000e+00 : f32
    %78 = vector.broadcast %cst_32 : f32 to vector<8x4xf32>
    %79 = arith.subf %77, %78 : vector<8x4xf32>
    %80 = arith.select %76, %74, %79 : vector<8x4xi1>, vector<8x4xf32>
    %81 = vector.extract_strided_slice %5 {offsets = [4, 0], sizes = [4, 16], strides = [1, 1]} : vector<8x16xf32> to vector<4x16xf32>
    %cst_33 = arith.constant dense<0.000000e+00> : vector<8x16xf32>
    %82 = tpu.matmul %80, %81, %cst_33 {dimension_numbers = #tpu.dot_dimension_numbers<[1], [0], [0], [1], [0, 0, 1, 1], [], []>} : vector<8x4xf32>, vector<4x16xf32>, vector<8x16xf32> -> vector<8x16xf32>
    %83 = arith.addf %45, %82 : vector<8x16xf32>
    %c0_34 = arith.constant 0 : index
    %c0_35 = arith.constant 0 : index
    %84 = vector.load %arg1[%c0_34, %c0_35] : memref<8x9xf32, #tpu.memory_space<vmem>>, vector<8x9xf32>
    %c0_36 = arith.constant 0 : index
    %c8 = arith.constant 8 : index
    %85 = vector.load %arg3[%c0_36, %c8] : memref<72x16xf32, #tpu.memory_space<vmem>>, vector<9x8xf32>
    %c16_37 = arith.constant 16 : index
    %c2 = arith.constant 2 : index
    %86 = vector.load %arg3[%c16_37, %c2] : memref<72x16xf32, #tpu.memory_space<vmem>>, vector<8x2xf32>
    %c24_38 = arith.constant 24 : index
    %c8_39 = arith.constant 8 : index
    %87 = vector.load %arg3[%c24_38, %c8_39] : memref<72x16xf32, #tpu.memory_space<vmem>>, vector<2x8xf32>
    %c40 = arith.constant 40 : index
    %c0_40 = arith.constant 0 : index
    %88 = vector.load %arg3[%c40, %c0_40] : memref<72x16xf32, #tpu.memory_space<vmem>>, vector<8x16xf32>
    %cst_41 = arith.constant dense<0.000000e+00> : vector<8x8xf32>
    %89 = tpu.matmul %84, %85, %cst_41 {dimension_numbers = #tpu.dot_dimension_numbers<[1], [0], [0], [1], [0, 0, 1, 1], [], []>} : vector<8x9xf32>, vector<9x8xf32>, vector<8x8xf32> -> vector<8x8xf32>
    %cst_42 = arith.constant dense<0.000000e+00> : vector<8x2xf32>
    %90 = tpu.matmul %89, %86, %cst_42 {dimension_numbers = #tpu.dot_dimension_numbers<[1], [0], [0], [1], [0, 0, 1, 1], [], []>} : vector<8x8xf32>, vector<8x2xf32>, vector<8x2xf32> -> vector<8x2xf32>
    %cst_43 = arith.constant dense<0.000000e+00> : vector<2x8xf32>
    %91 = tpu.matmul %87, %89, %cst_43 {dimension_numbers = #tpu.dot_dimension_numbers<[1], [1], [0], [0], [0, 0, 1, 0], [], []>} : vector<2x8xf32>, vector<8x8xf32>, vector<2x8xf32> -> vector<2x8xf32>
    %92 = vector.extract_strided_slice %90 {offsets = [0, 0], sizes = [8, 1], strides = [1, 1]} : vector<8x2xf32> to vector<8x1xf32>
    %93 = vector.extract_strided_slice %91 {offsets = [0, 0], sizes = [1, 8], strides = [1, 1]} : vector<2x8xf32> to vector<1x8xf32>
    %94 = vector.broadcast %92 : vector<8x1xf32> to vector<8x8xf32>
    %95 = vector.broadcast %93 : vector<1x8xf32> to vector<8x8xf32>
    %96 = arith.addf %94, %95 : vector<8x8xf32>
    %cst_44 = arith.constant 0.000000e+00 : f32
    %97 = vector.broadcast %cst_44 : f32 to vector<8x8xf32>
    %98 = arith.cmpf ogt, %96, %97 : vector<8x8xf32>
    %cst_45 = arith.constant 2.000000e-01 : f32
    %99 = vector.broadcast %cst_45 : f32 to vector<8x8xf32>
    %100 = arith.mulf %99, %96 : vector<8x8xf32>
    %101 = arith.select %98, %96, %100 : vector<8x8xi1>, vector<8x8xf32>
    %cst_46 = arith.constant 0.000000e+00 : f32
    %102 = vector.broadcast %cst_46 : f32 to vector<8x8xf32>
    %103 = arith.cmpf ogt, %0, %102 : vector<8x8xf32>
    %cst_47 = arith.constant 1.000000e+00 : f32
    %104 = vector.broadcast %cst_47 : f32 to vector<8x8xf32>
    %105 = arith.cmpf oeq, %0, %104 : vector<8x8xf32>
    %cst_48 = arith.constant 0.000000e+00 : f32
    %106 = vector.broadcast %cst_48 : f32 to vector<8x8xf32>
    %107 = arith.select %105, %101, %106 : vector<8x8xi1>, vector<8x8xf32>
    %cst_49 = arith.constant -3.000000e+01 : f32
    %108 = vector.broadcast %cst_49 : f32 to vector<8x8xf32>
    %109 = arith.select %103, %107, %108 : vector<8x8xi1>, vector<8x8xf32>
    %cst_50 = arith.constant dense<0xFF800000> : vector<8xf32>
    %110 = vector.multi_reduction <maximumf>, %109, %cst_50 [1] : vector<8x8xf32> to vector<8xf32>
    %111 = vector.shape_cast %110 : vector<8xf32> to vector<8x1xf32>
    %112 = vector.broadcast %111 : vector<8x1xf32> to vector<8x8xf32>
    %113 = arith.subf %109, %112 : vector<8x8xf32>
    %114 = math.exp %113 : vector<8x8xf32>
    %cst_51 = arith.constant dense<0.000000e+00> : vector<8xf32>
    %115 = vector.multi_reduction <add>, %114, %cst_51 [1] : vector<8x8xf32> to vector<8xf32>
    %116 = vector.shape_cast %115 : vector<8xf32> to vector<8x1xf32>
    %117 = vector.broadcast %116 : vector<8x1xf32> to vector<8x8xf32>
    %118 = arith.divf %114, %117 : vector<8x8xf32>
    %119 = vector.extract_strided_slice %89 {offsets = [0, 0], sizes = [8, 4], strides = [1, 1]} : vector<8x8xf32> to vector<8x4xf32>
    %cst_52 = arith.constant dense<0.000000e+00> : vector<8x4xf32>
    %120 = tpu.matmul %118, %119, %cst_52 {dimension_numbers = #tpu.dot_dimension_numbers<[0], [0], [1], [1], [0, 1, 1, 1], [], []>} : vector<8x8xf32>, vector<8x4xf32>, vector<8x4xf32> -> vector<8x4xf32>
    %cst_53 = arith.constant 0.000000e+00 : f32
    %121 = vector.broadcast %cst_53 : f32 to vector<8x4xf32>
    %122 = arith.cmpf ogt, %120, %121 : vector<8x4xf32>
    %123 = math.exp %120 : vector<8x4xf32>
    %cst_54 = arith.constant 1.000000e+00 : f32
    %124 = vector.broadcast %cst_54 : f32 to vector<8x4xf32>
    %125 = arith.subf %123, %124 : vector<8x4xf32>
    %126 = arith.select %122, %120, %125 : vector<8x4xi1>, vector<8x4xf32>
    %127 = vector.extract_strided_slice %88 {offsets = [0, 0], sizes = [4, 16], strides = [1, 1]} : vector<8x16xf32> to vector<4x16xf32>
    %cst_55 = arith.constant dense<0.000000e+00> : vector<8x16xf32>
    %128 = tpu.matmul %126, %127, %cst_55 {dimension_numbers = #tpu.dot_dimension_numbers<[1], [0], [0], [1], [0, 0, 1, 1], [], []>} : vector<8x4xf32>, vector<4x16xf32>, vector<8x16xf32> -> vector<8x16xf32>
    %129 = vector.extract_strided_slice %90 {offsets = [0, 1], sizes = [8, 1], strides = [1, 1]} : vector<8x2xf32> to vector<8x1xf32>
    %130 = vector.extract_strided_slice %91 {offsets = [1, 0], sizes = [1, 8], strides = [1, 1]} : vector<2x8xf32> to vector<1x8xf32>
    %131 = vector.broadcast %129 : vector<8x1xf32> to vector<8x8xf32>
    %132 = vector.broadcast %130 : vector<1x8xf32> to vector<8x8xf32>
    %133 = arith.addf %131, %132 : vector<8x8xf32>
    %cst_56 = arith.constant 0.000000e+00 : f32
    %134 = vector.broadcast %cst_56 : f32 to vector<8x8xf32>
    %135 = arith.cmpf ogt, %133, %134 : vector<8x8xf32>
    %cst_57 = arith.constant 2.000000e-01 : f32
    %136 = vector.broadcast %cst_57 : f32 to vector<8x8xf32>
    %137 = arith.mulf %136, %133 : vector<8x8xf32>
    %138 = arith.select %135, %133, %137 : vector<8x8xi1>, vector<8x8xf32>
    %cst_58 = arith.constant 0.000000e+00 : f32
    %139 = vector.broadcast %cst_58 : f32 to vector<8x8xf32>
    %140 = arith.cmpf ogt, %0, %139 : vector<8x8xf32>
    %cst_59 = arith.constant 1.000000e+00 : f32
    %141 = vector.broadcast %cst_59 : f32 to vector<8x8xf32>
    %142 = arith.cmpf oeq, %0, %141 : vector<8x8xf32>
    %cst_60 = arith.constant 0.000000e+00 : f32
    %143 = vector.broadcast %cst_60 : f32 to vector<8x8xf32>
    %144 = arith.select %142, %138, %143 : vector<8x8xi1>, vector<8x8xf32>
    %cst_61 = arith.constant -3.000000e+01 : f32
    %145 = vector.broadcast %cst_61 : f32 to vector<8x8xf32>
    %146 = arith.select %140, %144, %145 : vector<8x8xi1>, vector<8x8xf32>
    %cst_62 = arith.constant dense<0xFF800000> : vector<8xf32>
    %147 = vector.multi_reduction <maximumf>, %146, %cst_62 [1] : vector<8x8xf32> to vector<8xf32>
    %148 = vector.shape_cast %147 : vector<8xf32> to vector<8x1xf32>
    %149 = vector.broadcast %148 : vector<8x1xf32> to vector<8x8xf32>
    %150 = arith.subf %146, %149 : vector<8x8xf32>
    %151 = math.exp %150 : vector<8x8xf32>
    %cst_63 = arith.constant dense<0.000000e+00> : vector<8xf32>
    %152 = vector.multi_reduction <add>, %151, %cst_63 [1] : vector<8x8xf32> to vector<8xf32>
    %153 = vector.shape_cast %152 : vector<8xf32> to vector<8x1xf32>
    %154 = vector.broadcast %153 : vector<8x1xf32> to vector<8x8xf32>
    %155 = arith.divf %151, %154 : vector<8x8xf32>
    %156 = vector.extract_strided_slice %89 {offsets = [0, 4], sizes = [8, 4], strides = [1, 1]} : vector<8x8xf32> to vector<8x4xf32>
    %cst_64 = arith.constant dense<0.000000e+00> : vector<8x4xf32>
    %157 = tpu.matmul %155, %156, %cst_64 {dimension_numbers = #tpu.dot_dimension_numbers<[0], [0], [1], [1], [0, 1, 1, 1], [], []>} : vector<8x8xf32>, vector<8x4xf32>, vector<8x4xf32> -> vector<8x4xf32>
    %cst_65 = arith.constant 0.000000e+00 : f32
    %158 = vector.broadcast %cst_65 : f32 to vector<8x4xf32>
    %159 = arith.cmpf ogt, %157, %158 : vector<8x4xf32>
    %160 = math.exp %157 : vector<8x4xf32>
    %cst_66 = arith.constant 1.000000e+00 : f32
    %161 = vector.broadcast %cst_66 : f32 to vector<8x4xf32>
    %162 = arith.subf %160, %161 : vector<8x4xf32>
    %163 = arith.select %159, %157, %162 : vector<8x4xi1>, vector<8x4xf32>
    %164 = vector.extract_strided_slice %88 {offsets = [4, 0], sizes = [4, 16], strides = [1, 1]} : vector<8x16xf32> to vector<4x16xf32>
    %cst_67 = arith.constant dense<0.000000e+00> : vector<8x16xf32>
    %165 = tpu.matmul %163, %164, %cst_67 {dimension_numbers = #tpu.dot_dimension_numbers<[1], [0], [0], [1], [0, 0, 1, 1], [], []>} : vector<8x4xf32>, vector<4x16xf32>, vector<8x16xf32> -> vector<8x16xf32>
    %166 = arith.addf %128, %165 : vector<8x16xf32>
    %c48 = arith.constant 48 : index
    %c0_68 = arith.constant 0 : index
    %167 = vector.load %arg3[%c48, %c0_68] : memref<72x16xf32, #tpu.memory_space<vmem>>, vector<1x16xf32>
    %c56 = arith.constant 56 : index
    %c0_69 = arith.constant 0 : index
    %168 = vector.load %arg3[%c56, %c0_69] : memref<72x16xf32, #tpu.memory_space<vmem>>, vector<16x2xf32>
    %c50 = arith.constant 50 : index
    %c0_70 = arith.constant 0 : index
    %169 = vector.load %arg3[%c50, %c0_70] : memref<72x16xf32, #tpu.memory_space<vmem>>, vector<1x2xf32>
    %cst_71 = arith.constant dense<0.000000e+00> : vector<8x16xf32>
    %170 = tpu.matmul %0, %83, %cst_71 {dimension_numbers = #tpu.dot_dimension_numbers<[1], [0], [0], [1], [0, 0, 1, 1], [], []>} : vector<8x8xf32>, vector<8x16xf32>, vector<8x16xf32> -> vector<8x16xf32>
    %171 = vector.broadcast %167 : vector<1x16xf32> to vector<8x16xf32>
    %172 = arith.addf %170, %171 : vector<8x16xf32>
    %cst_72 = arith.constant 0.000000e+00 : f32
    %173 = vector.broadcast %cst_72 : f32 to vector<8x16xf32>
    %174 = arith.maximumf %172, %173 : vector<8x16xf32>
    %cst_73 = arith.constant dense<0.000000e+00> : vector<8x2xf32>
    %175 = tpu.matmul %174, %168, %cst_73 {dimension_numbers = #tpu.dot_dimension_numbers<[1], [0], [0], [1], [0, 0, 1, 1], [], []>} : vector<8x16xf32>, vector<16x2xf32>, vector<8x2xf32> -> vector<8x2xf32>
    %cst_74 = arith.constant dense<0.000000e+00> : vector<8x2xf32>
    %176 = tpu.matmul %0, %175, %cst_74 {dimension_numbers = #tpu.dot_dimension_numbers<[1], [0], [0], [1], [0, 0, 1, 1], [], []>} : vector<8x8xf32>, vector<8x2xf32>, vector<8x2xf32> -> vector<8x2xf32>
    %177 = vector.broadcast %169 : vector<1x2xf32> to vector<8x2xf32>
    %178 = arith.addf %176, %177 : vector<8x2xf32>
    %c49 = arith.constant 49 : index
    %c0_75 = arith.constant 0 : index
    %179 = vector.load %arg3[%c49, %c0_75] : memref<72x16xf32, #tpu.memory_space<vmem>>, vector<1x16xf32>
    %c56_76 = arith.constant 56 : index
    %c2_77 = arith.constant 2 : index
    %180 = vector.load %arg3[%c56_76, %c2_77] : memref<72x16xf32, #tpu.memory_space<vmem>>, vector<16x2xf32>
    %c51 = arith.constant 51 : index
    %c0_78 = arith.constant 0 : index
    %181 = vector.load %arg3[%c51, %c0_78] : memref<72x16xf32, #tpu.memory_space<vmem>>, vector<1x2xf32>
    %cst_79 = arith.constant dense<0.000000e+00> : vector<8x16xf32>
    %182 = tpu.matmul %0, %166, %cst_79 {dimension_numbers = #tpu.dot_dimension_numbers<[1], [0], [0], [1], [0, 0, 1, 1], [], []>} : vector<8x8xf32>, vector<8x16xf32>, vector<8x16xf32> -> vector<8x16xf32>
    %183 = vector.broadcast %179 : vector<1x16xf32> to vector<8x16xf32>
    %184 = arith.addf %182, %183 : vector<8x16xf32>
    %cst_80 = arith.constant 0.000000e+00 : f32
    %185 = vector.broadcast %cst_80 : f32 to vector<8x16xf32>
    %186 = arith.maximumf %184, %185 : vector<8x16xf32>
    %cst_81 = arith.constant dense<0.000000e+00> : vector<8x2xf32>
    %187 = tpu.matmul %186, %180, %cst_81 {dimension_numbers = #tpu.dot_dimension_numbers<[1], [0], [0], [1], [0, 0, 1, 1], [], []>} : vector<8x16xf32>, vector<16x2xf32>, vector<8x2xf32> -> vector<8x2xf32>
    %cst_82 = arith.constant dense<0.000000e+00> : vector<8x2xf32>
    %188 = tpu.matmul %0, %187, %cst_82 {dimension_numbers = #tpu.dot_dimension_numbers<[1], [0], [0], [1], [0, 0, 1, 1], [], []>} : vector<8x8xf32>, vector<8x2xf32>, vector<8x2xf32> -> vector<8x2xf32>
    %189 = vector.broadcast %181 : vector<1x2xf32> to vector<8x2xf32>
    %190 = arith.addf %188, %189 : vector<8x2xf32>
    %cst_83 = arith.constant dense<0xFF800000> : vector<8xf32>
    %191 = vector.multi_reduction <maximumf>, %178, %cst_83 [1] : vector<8x2xf32> to vector<8xf32>
    %192 = vector.shape_cast %191 : vector<8xf32> to vector<8x1xf32>
    %193 = vector.broadcast %192 : vector<8x1xf32> to vector<8x2xf32>
    %194 = arith.subf %178, %193 : vector<8x2xf32>
    %195 = math.exp %194 : vector<8x2xf32>
    %cst_84 = arith.constant dense<0.000000e+00> : vector<8xf32>
    %196 = vector.multi_reduction <add>, %195, %cst_84 [1] : vector<8x2xf32> to vector<8xf32>
    %197 = vector.shape_cast %196 : vector<8xf32> to vector<8x1xf32>
    %198 = math.log %197 : vector<8x1xf32>
    %199 = arith.addf %192, %198 : vector<8x1xf32>
    %200 = vector.broadcast %199 : vector<8x1xf32> to vector<8x2xf32>
    %201 = arith.subf %178, %200 : vector<8x2xf32>
    %cst_85 = arith.constant 0.000000e+00 : f32
    %202 = vector.broadcast %cst_85 : f32 to vector<8x2xf32>
    %203 = arith.cmpf ogt, %190, %202 : vector<8x2xf32>
    %cst_86 = arith.constant 0.00999999977 : f32
    %204 = vector.broadcast %cst_86 : f32 to vector<8x2xf32>
    %205 = arith.mulf %204, %190 : vector<8x2xf32>
    %206 = arith.select %203, %190, %205 : vector<8x2xi1>, vector<8x2xf32>
    %c0_87 = arith.constant 0 : index
    %c0_88 = arith.constant 0 : index
    %207 = vector.load %arg4[%c0_87, %c0_88] : memref<8x4xf32, #tpu.memory_space<vmem>>, vector<8x2xf32>
    tpu.vector_store %arg4[%c0_87, %c0_88], %201 {strides = array<i32>} : memref<8x4xf32, #tpu.memory_space<vmem>>, vector<8x2xf32>,
    %c0_89 = arith.constant 0 : index
    %c2_90 = arith.constant 2 : index
    %208 = vector.load %arg4[%c0_89, %c2_90] : memref<8x4xf32, #tpu.memory_space<vmem>>, vector<8x2xf32>
    tpu.vector_store %arg4[%c0_89, %c2_90], %206 {strides = array<i32>} : memref<8x4xf32, #tpu.memory_space<vmem>>, vector<8x2xf32>,
    return
  }
}

</mosaic_0001>

<llo_original>
// kernel: gcn_forward.1
$region0: #{gcn_forward.1}
  #allocation0 [shape = 'u32[]', space=smem, size = 0x4, offset = 0x4, fixed_abs, tag = 'smem constant byte address 0x4 - core index']
  #allocation1 [shape = 'u32[144,128]{1,0:T(1,128)}', space=vmem, size = 0x12000, scoped, tag = 'internal scratch']
  %s0 = inlined_call_operand.vmem [shape: f32[8,9], index: 0, kind: input, shape index: {}]
  %s1 = inlined_call_operand.vmem [shape: f32[8,9], index: 1, kind: input, shape index: {}]
  %s2 = inlined_call_operand.vmem [shape: f32[8,8], index: 2, kind: input, shape index: {}]
  %s3 = inlined_call_operand.vmem [shape: f32[72,16], index: 3, kind: input, shape index: {}]
  %s4 = inlined_call_operand.vmem [shape: f32[8,4], index: 4, kind: output, shape index: {}]
  %s5 = sld [smem:[#allocation0]]
  $region26: #{gcn_forward.1} parent=0
    _
  %s7 = ssub.s32 1, %s5
  %s8 = scalar_select 0, %s7, %s5
  // Predicated region
  $region2: #{gcn_forward.1} parent=0 // pred_check
    _
  $region3: #{gcn_forward.1} parent=0 // pred_check_branch
    %10 = sbr.rel (0) target = $region5
  $region4: #{gcn_forward.1} parent=0 // pred_region
    _
  $region5: #{gcn_forward.1} parent=0 // pred_fallthru
    _
  // Predicated region
  $region6: #{gcn_forward.1} parent=0 // pred_check
    _
  $region7: #{gcn_forward.1} parent=0 // pred_check_branch
    %12 = sbr.rel (0) target = $region9
  $region8: #{gcn_forward.1} parent=0 // pred_region
    _
  $region9: #{gcn_forward.1} parent=0 // pred_fallthru
    _
  // Predicated region
  $region10: #{gcn_forward.1} parent=0 // pred_check
    _
  $region11: #{gcn_forward.1} parent=0 // pred_check_branch
    %14 = sbr.rel (0) target = $region13
  $region12: #{gcn_forward.1} parent=0 // pred_region
    _
  $region13: #{gcn_forward.1} parent=0 // pred_fallthru
    _
  // Predicated region
  $region14: #{gcn_forward.1} parent=0 // pred_check
    _
  $region15: #{gcn_forward.1} parent=0 // pred_check_branch
    %16 = sbr.rel (0) target = $region17
  $region16: #{gcn_forward.1} parent=0 // pred_region
    _
  $region17: #{gcn_forward.1} parent=0 // pred_fallthru
    _
  %v17 = vld [vmem:[%s2] sm:$0xff]
  %v18 = vld [vmem:[%s0] sm:$0xff]
  %v19 = vld [vmem:[%s3] sm:$0xff]
  %v20 = vld [vmem:[%s3 + $0x8] sm:$0x1]
  %v21 = vld [vmem:[%s3 + $0x10] sm:$0xff]
  %v22 = vld [vmem:[%s3 + $0x18] sm:$0x3]
  %v23 = vld [vmem:[%s3 + $0x20] sm:$0xff]
  %vm24 = vcmask 72704
  %v26 = vsel %vm24, %v18, 0
  %vm28 = vcmask 1040384
  %v30 = vsel %vm28, %v20, 0
  %32 = vmatprep.subr.mxu0 0.0
  %33 = vmatpush1.msra.mxu0 %v19
  %34 = vmatprep.subr.mxu0 0.0
  %35 = vmatpush1.msra.mxu0 %v30
  %36 = vmatprep.subr.mxu0 0.0
  %37 = vmatpush1.msra.mxu0 0.0
  %38 = vmatprep.subr.mxu0 0.0
  %39 = vmatpush1.msra.mxu0 0.0
  %40 = vmatprep.subr.mxu0 0.0
  %41 = vmatpush1.msra.mxu0 0.0
  %42 = vmatprep.subr.mxu0 0.0
  %43 = vmatpush1.msra.mxu0 0.0
  %44 = vmatprep.subr.mxu0 0.0
  %45 = vmatpush1.msra.mxu0 0.0
  %46 = vmatprep.subr.mxu0 0.0
  %47 = vmatpush1.msra.mxu0 0.0
  %48 = vmatprep.subr.mxu0 0.0
  %49 = vmatpush1.msra.mxu0 0.0
  %50 = vmatprep.subr.mxu0 0.0
  %51 = vmatpush1.msra.mxu0 0.0
  %52 = vmatprep.subr.mxu0 0.0
  %53 = vmatpush1.msra.mxu0 0.0
  %54 = vmatprep.subr.mxu0 0.0
  %55 = vmatpush1.msra.mxu0 0.0
  %56 = vmatprep.subr.mxu0 0.0
  %57 = vmatpush1.msra.mxu0 0.0
  %58 = vmatprep.subr.mxu0 0.0
  %59 = vmatpush1.msra.mxu0 0.0
  %60 = vmatprep.subr.mxu0 0.0
  %61 = vmatpush1.msra.mxu0 0.0
  %62 = vmatprep.subr.mxu0 0.0
  %63 = vmatpush1.msra.mxu0 0.0
  %64 = vmatprep.subr.mxu0 0.0
  %65 = vmatpush1.msra.mxu0 0.0
  %66 = vmatprep.subr.mxu0 0.0
  %67 = vmatpush1.msra.mxu0 0.0
  %68 = vmatprep.subr.mxu0 0.0
  %69 = vmatpush1.msra.mxu0 0.0
  %70 = vmatprep.subr.mxu0 0.0
  %71 = vmatpush1.msra.mxu0 0.0
  %72 = vmatprep.subr.mxu0 0.0
  %73 = vmatpush1.msra.mxu0 0.0
  %74 = vmatprep.subr.mxu0 0.0
  %75 = vmatpush1.msra.mxu0 0.0
  %76 = vmatprep.subr.mxu0 0.0
  %77 = vmatpush1.msra.mxu0 0.0
  %78 = vmatprep.subr.mxu0 0.0
  %79 = vmatpush1.msra.mxu0 0.0
  %80 = vmatprep.subr.mxu0 0.0
  %81 = vmatpush1.msra.mxu0 0.0
  %82 = vmatprep.subr.mxu0 0.0
  %83 = vmatpush1.msra.mxu0 0.0
  %84 = vmatprep.subr.mxu0 0.0
  %85 = vmatpush1.msra.mxu0 0.0
  %86 = vmatprep.subr.mxu0 0.0
  %87 = vmatpush1.msra.mxu0 0.0
  %88 = vmatprep.subr.mxu0 0.0
  %89 = vmatpush1.msra.mxu0 0.0
  %90 = vmatprep.subr.mxu0 0.0
  %91 = vmatpush1.msra.mxu0 0.0
  %92 = vmatprep.subr.mxu0 0.0
  %93 = vmatpush1.msra.mxu0 0.0
  %94 = vmatprep.subr.mxu0 0.0
  %95 = vmatpush1.msra.mxu0 0.0
  %96 = vmatprep.mubr.f32.mxu0 0.0
  %97 = vmatmul.mubr.f32.gmra.mrb[0].mxu0 %v26
  %v98 = vpop.f32.mrb[0].mxu0
  %v99 = vadd.f32 0.0, %v98
  %v100 = vpop.f32.mrb[0].mxu0
  %101 = vdwg.mxu0
  %vm102 = vcmask 64512
  %v104 = vsel %vm102, %v99, 0
  %106 = vmatprep.subr.mxu0 0.0
  %107 = vmatpush1.msra.mxu0 %v21
  %108 = vmatprep.subr.mxu0 0.0
  %109 = vmatpush1.msra.mxu0 0.0
  %110 = vmatprep.subr.mxu0 0.0
  %111 = vmatpush1.msra.mxu0 0.0
  %112 = vmatprep.subr.mxu0 0.0
  %113 = vmatpush1.msra.mxu0 0.0
  %114 = vmatprep.subr.mxu0 0.0
  %115 = vmatpush1.msra.mxu0 0.0
  %116 = vmatprep.subr.mxu0 0.0
  %117 = vmatpush1.msra.mxu0 0.0
  %118 = vmatprep.subr.mxu0 0.0
  %119 = vmatpush1.msra.mxu0 0.0
  %120 = vmatprep.subr.mxu0 0.0
  %121 = vmatpush1.msra.mxu0 0.0
  %122 = vmatprep.subr.mxu0 0.0
  %123 = vmatpush1.msra.mxu0 0.0
  %124 = vmatprep.subr.mxu0 0.0
  %125 = vmatpush1.msra.mxu0 0.0
  %126 = vmatprep.subr.mxu0 0.0
  %127 = vmatpush1.msra.mxu0 0.0
  %128 = vmatprep.subr.mxu0 0.0
  %129 = vmatpush1.msra.mxu0 0.0
  %130 = vmatprep.subr.mxu0 0.0
  %131 = vmatpush1.msra.mxu0 0.0
  %132 = vmatprep.subr.mxu0 0.0
  %133 = vmatpush1.msra.mxu0 0.0
  %134 = vmatprep.subr.mxu0 0.0
  %135 = vmatpush1.msra.mxu0 0.0
  %136 = vmatprep.subr.mxu0 0.0
  %137 = vmatpush1.msra.mxu0 0.0
  %138 = vmatprep.subr.mxu0 0.0
  %139 = vmatpush1.msra.mxu0 0.0
  %140 = vmatprep.subr.mxu0 0.0
  %141 = vmatpush1.msra.mxu0 0.0
  %142 = vmatprep.subr.mxu0 0.0
  %143 = vmatpush1.msra.mxu0 0.0
  %144 = vmatprep.subr.mxu0 0.0
  %145 = vmatpush1.msra.mxu0 0.0
  %146 = vmatprep.subr.mxu0 0.0
  %147 = vmatpush1.msra.mxu0 0.0
  %148 = vmatprep.subr.mxu0 0.0
  %149 = vmatpush1.msra.mxu0 0.0
  %150 = vmatprep.subr.mxu0 0.0
  %151 = vmatpush1.msra.mxu0 0.0
  %152 = vmatprep.subr.mxu0 0.0
  %153 = vmatpush1.msra.mxu0 0.0
  %154 = vmatprep.subr.mxu0 0.0
  %155 = vmatpush1.msra.mxu0 0.0
  %156 = vmatprep.subr.mxu0 0.0
  %157 = vmatpush1.msra.mxu0 0.0
  %158 = vmatprep.subr.mxu0 0.0
  %159 = vmatpush1.msra.mxu0 0.0
  %160 = vmatprep.subr.mxu0 0.0
  %161 = vmatpush1.msra.mxu0 0.0
  %162 = vmatprep.subr.mxu0 0.0
  %163 = vmatpush1.msra.mxu0 0.0
  %164 = vmatprep.subr.mxu0 0.0
  %165 = vmatpush1.msra.mxu0 0.0
  %166 = vmatprep.subr.mxu0 0.0
  %167 = vmatpush1.msra.mxu0 0.0
  %168 = vmatprep.subr.mxu0 0.0
  %169 = vmatpush1.msra.mxu0 0.0
  %170 = vmatprep.mubr.f32.mxu0 0.0
  %171 = vmatmul.mubr.f32.gmra.mrb[0].mxu0 %v104
  %v172 = vpop.f32.mrb[0].mxu0
  %v173 = vadd.f32 0.0, %v172
  %v174 = vpop.f32.mrb[0].mxu0
  %175 = vdwg.mxu0
  %v177 = vsel %vm102, %v22, 0
  %179 = vmatprep.subr.mxu0 0.0
  %180 = vmatpush1.xpose.msra.mxu0 %v104
  %181 = vmatprep.subr.mxu0 0.0
  %182 = vmatpush1.xpose.msra.mxu0 0.0
  %183 = vmatprep.subr.mxu0 0.0
  %184 = vmatpush1.xpose.msra.mxu0 0.0
  %185 = vmatprep.subr.mxu0 0.0
  %186 = vmatpush1.xpose.msra.mxu0 0.0
  %187 = vmatprep.subr.mxu0 0.0
  %188 = vmatpush1.xpose.msra.mxu0 0.0
  %189 = vmatprep.subr.mxu0 0.0
  %190 = vmatpush1.xpose.msra.mxu0 0.0
  %191 = vmatprep.subr.mxu0 0.0
  %192 = vmatpush1.xpose.msra.mxu0 0.0
  %193 = vmatprep.subr.mxu0 0.0
  %194 = vmatpush1.xpose.msra.mxu0 0.0
  %195 = vmatprep.subr.mxu0 0.0
  %196 = vmatpush1.xpose.msra.mxu0 0.0
  %197 = vmatprep.subr.mxu0 0.0
  %198 = vmatpush1.xpose.msra.mxu0 0.0
  %199 = vmatprep.subr.mxu0 0.0
  %200 = vmatpush1.xpose.msra.mxu0 0.0
  %201 = vmatprep.subr.mxu0 0.0
  %202 = vmatpush1.xpose.msra.mxu0 0.0
  %203 = vmatprep.subr.mxu0 0.0
  %204 = vmatpush1.xpose.msra.mxu0 0.0
  %205 = vmatprep.subr.mxu0 0.0
  %206 = vmatpush1.xpose.msra.mxu0 0.0
  %207 = vmatprep.subr.mxu0 0.0
  %208 = vmatpush1.xpose.msra.mxu0 0.0
  %209 = vmatprep.subr.mxu0 0.0
  %210 = vmatpush1.xpose.msra.mxu0 0.0
  %211 = vmatprep.subr.mxu0 0.0
  %212 = vmatpush1.xpose.msra.mxu0 0.0
  %213 = vmatprep.subr.mxu0 0.0
  %214 = vmatpush1.xpose.msra.mxu0 0.0
  %215 = vmatprep.subr.mxu0 0.0
  %216 = vmatpush1.xpose.msra.mxu0 0.0
  %217 = vmatprep.subr.mxu0 0.0
  %218 = vmatpush1.xpose.msra.mxu0 0.0
  %219 = vmatprep.subr.mxu0 0.0
  %220 = vmatpush1.xpose.msra.mxu0 0.0
  %221 = vmatprep.subr.mxu0 0.0
  %222 = vmatpush1.xpose.msra.mxu0 0.0
  %223 = vmatprep.subr.mxu0 0.0
  %224 = vmatpush1.xpose.msra.mxu0 0.0
  %225 = vmatprep.subr.mxu0 0.0
  %226 = vmatpush1.xpose.msra.mxu0 0.0
  %227 = vmatprep.subr.mxu0 0.0
  %228 = vmatpush1.xpose.msra.mxu0 0.0
  %229 = vmatprep.subr.mxu0 0.0
  %230 = vmatpush1.xpose.msra.mxu0 0.0
  %231 = vmatprep.subr.mxu0 0.0
  %232 = vmatpush1.xpose.msra.mxu0 0.0
  %233 = vmatprep.subr.mxu0 0.0
  %234 = vmatpush1.xpose.msra.mxu0 0.0
  %235 = vmatprep.subr.mxu0 0.0
  %236 = vmatpush1.xpose.msra.mxu0 0.0
  %237 = vmatprep.subr.mxu0 0.0
  %238 = vmatpush1.xpose.msra.mxu0 0.0
  %239 = vmatprep.subr.mxu0 0.0
  %240 = vmatpush1.xpose.msra.mxu0 0.0
  %241 = vmatprep.subr.mxu0 0.0
  %242 = vmatpush1.xpose.msra.mxu0 0.0
  %243 = vmatprep.mubr.f32.mxu0 0.0
  %244 = vmatmul.mubr.f32.gmra.mrb[0].mxu0 %v177
  %v245 = vpop.f32.mrb[0].mxu0
  %v246 = vadd.f32 0.0, %v245
  %v247 = vpop.f32.mrb[0].mxu0
  %248 = vdwg.mxu0
  %250 = vset.pattern.permute.xlu0 0
  %251 = vperm.xlu0 %250, %v173
  %v252 = vpop.permute.xlu0 %251
  %v254 = vlaneseq
  %v255 = vshrl.u32 %v254, 7
  %v256 = vsub.s32 0, %v255
  %v257 = vrot.slane %v246, %v256
  %v258 = vadd.f32 %v252, %v257
  %vm259 = vcmp.gt.f32.partialorder %v258, 0.0
  %v260 = vmul.f32 %v258, 0.2
  %v261 = vsel %vm259, %v258, %v260
  %vm262 = vcmp.gt.f32.partialorder %v17, 0.0
  %vm263 = vcmp.eq.f32.partialorder %v17, 1.0
  %v264 = vsel %vm263, %v261, 0.0
  %v265 = vsel %vm262, %v264, -30.0
  %v266 = vsel %vm102, %v265, -inf
  %267 = vmax.xlane.f32.xlu0 %v266
  %v268 = vpop.xlane.xlu0 %267
  %v269 = vsub.f32 %v265, %v268
  %v270 = vmul.f32 %v269, 1.442695
  %v271 = vpow.pop %v270
  %v272 = vsel %vm102, %v271, 0.0
  %273 = vadd.xlane.f32.xlu0 %v272
  %v274 = vpop.xlane.xlu0 %273
  %v275 = vrcp.pop %v274
  %v276 = vmul.f32 %v271, %v275
  %277 = vxpose.xlu0.b32.start [1/16] %v276, 128
  %278 = vxpose.xlu0.b32.cont [2/16] 0.0, 128
  %279 = vxpose.xlu0.b32.cont [3/16] 0.0, 128
  %280 = vxpose.xlu0.b32.cont [4/16] 0.0, 128
  %281 = vxpose.xlu0.b32.cont [5/16] 0.0, 128
  %282 = vxpose.xlu0.b32.cont [6/16] 0.0, 128
  %283 = vxpose.xlu0.b32.cont [7/16] 0.0, 128
  %284 = vxpose.xlu0.b32.cont [8/16] 0.0, 128
  %285 = vxpose.xlu0.b32.cont [9/16] 0.0, 128
  %286 = vxpose.xlu0.b32.cont [10/16] 0.0, 128
  %287 = vxpose.xlu0.b32.cont [11/16] 0.0, 128
  %288 = vxpose.xlu0.b32.cont [12/16] 0.0, 128
  %289 = vxpose.xlu0.b32.cont [13/16] 0.0, 128
  %290 = vxpose.xlu0.b32.cont [14/16] 0.0, 128
  %291 = vxpose.xlu0.b32.cont [15/16] 0.0, 128
  %292 = vxpose.xlu0.b32.end [16/16] 0.0, 128
  %v293 = vpop.trf.xlu0
  %v294 = vpop.trf.xlu0
  %v295 = vpop.trf.xlu0
  %v296 = vpop.trf.xlu0
  %v297 = vpop.trf.xlu0
  %v298 = vpop.trf.xlu0
  %v299 = vpop.trf.xlu0
  %v300 = vpop.trf.xlu0
  %v301 = vpop.trf.xlu0
  %v302 = vpop.trf.xlu0
  %v303 = vpop.trf.xlu0
  %v304 = vpop.trf.xlu0
  %v305 = vpop.trf.xlu0
  %v306 = vpop.trf.xlu0
  %v307 = vpop.trf.xlu0
  %v308 = vpop.trf.xlu0
  %v310 = vsel %vm102, %v293, 0
  %312 = vmatprep.subr.mxu0 0.0
  %313 = vmatpush1.msra.mxu0 %v99
  %314 = vmatprep.subr.mxu0 0.0
  %315 = vmatpush1.msra.mxu0 0.0
  %316 = vmatprep.subr.mxu0 0.0
  %317 = vmatpush1.msra.mxu0 0.0
  %318 = vmatprep.subr.mxu0 0.0
  %319 = vmatpush1.msra.mxu0 0.0
  %320 = vmatprep.subr.mxu0 0.0
  %321 = vmatpush1.msra.mxu0 0.0
  %322 = vmatprep.subr.mxu0 0.0
  %323 = vmatpush1.msra.mxu0 0.0
  %324 = vmatprep.subr.mxu0 0.0
  %325 = vmatpush1.msra.mxu0 0.0
  %326 = vmatprep.subr.mxu0 0.0
  %327 = vmatpush1.msra.mxu0 0.0
  %328 = vmatprep.subr.mxu0 0.0
  %329 = vmatpush1.msra.mxu0 0.0
  %330 = vmatprep.subr.mxu0 0.0
  %331 = vmatpush1.msra.mxu0 0.0
  %332 = vmatprep.subr.mxu0 0.0
  %333 = vmatpush1.msra.mxu0 0.0
  %334 = vmatprep.subr.mxu0 0.0
  %335 = vmatpush1.msra.mxu0 0.0
  %336 = vmatprep.subr.mxu0 0.0
  %337 = vmatpush1.msra.mxu0 0.0
  %338 = vmatprep.subr.mxu0 0.0
  %339 = vmatpush1.msra.mxu0 0.0
  %340 = vmatprep.subr.mxu0 0.0
  %341 = vmatpush1.msra.mxu0 0.0
  %342 = vmatprep.subr.mxu0 0.0
  %343 = vmatpush1.msra.mxu0 0.0
  %344 = vmatprep.subr.mxu0 0.0
  %345 = vmatpush1.msra.mxu0 0.0
  %346 = vmatprep.subr.mxu0 0.0
  %347 = vmatpush1.msra.mxu0 0.0
  %348 = vmatprep.subr.mxu0 0.0
  %349 = vmatpush1.msra.mxu0 0.0
  %350 = vmatprep.subr.mxu0 0.0
  %351 = vmatpush1.msra.mxu0 0.0
  %352 = vmatprep.subr.mxu0 0.0
  %353 = vmatpush1.msra.mxu0 0.0
  %354 = vmatprep.subr.mxu0 0.0
  %355 = vmatpush1.msra.mxu0 0.0
  %356 = vmatprep.subr.mxu0 0.0
  %357 = vmatpush1.msra.mxu0 0.0
  %358 = vmatprep.subr.mxu0 0.0
  %359 = vmatpush1.msra.mxu0 0.0
  %360 = vmatprep.subr.mxu0 0.0
  %361 = vmatpush1.msra.mxu0 0.0
  %362 = vmatprep.subr.mxu0 0.0
  %363 = vmatpush1.msra.mxu0 0.0
  %364 = vmatprep.subr.mxu0 0.0
  %365 = vmatpush1.msra.mxu0 0.0
  %366 = vmatprep.subr.mxu0 0.0
  %367 = vmatpush1.msra.mxu0 0.0
  %368 = vmatprep.subr.mxu0 0.0
  %369 = vmatpush1.msra.mxu0 0.0
  %370 = vmatprep.subr.mxu0 0.0
  %371 = vmatpush1.msra.mxu0 0.0
  %372 = vmatprep.subr.mxu0 0.0
  %373 = vmatpush1.msra.mxu0 0.0
  %374 = vmatprep.subr.mxu0 0.0
  %375 = vmatpush1.msra.mxu0 0.0
  %376 = vmatprep.mubr.f32.mxu0 0.0
  %377 = vmatmul.mubr.f32.gmra.mrb[0].mxu0 %v310
  %v378 = vpop.f32.mrb[0].mxu0
  %v379 = vadd.f32 0.0, %v378
  %v380 = vpop.f32.mrb[0].mxu0
  %381 = vdwg.mxu0
  %vm382 = vcmp.gt.f32.partialorder %v379, 0.0
  %v383 = vmul.f32 %v379, 1.442695
  %v384 = vpow.pop %v383
  %v385 = vsub.f32 %v384, 1.0
  %v386 = vsel %vm382, %v379, %v385
  %387 = vset.pattern.permute.xlu0 1
  %388 = vperm.xlu0 %387, %v173
  %v389 = vpop.permute.xlu0 %388
  %v391 = vlaneseq
  %v392 = vshrl.u32 %v391, 7
  %v393 = vsub.s32 1, %v392
  %v394 = vrot.slane %v246, %v393
  %v395 = vadd.f32 %v389, %v394
  %vm396 = vcmp.gt.f32.partialorder %v395, 0.0
  %v397 = vmul.f32 %v395, 0.2
  %v398 = vsel %vm396, %v395, %v397
  %v399 = vsel %vm263, %v398, 0.0
  %v400 = vsel %vm262, %v399, -30.0
  %v401 = vsel %vm102, %v400, -inf
  %402 = vmax.xlane.f32.xlu0 %v401
  %v403 = vpop.xlane.xlu0 %402
  %v404 = vsub.f32 %v400, %v403
  %v405 = vmul.f32 %v404, 1.442695
  %v406 = vpow.pop %v405
  %v407 = vsel %vm102, %v406, 0.0
  %408 = vadd.xlane.f32.xlu0 %v407
  %v409 = vpop.xlane.xlu0 %408
  %v410 = vrcp.pop %v409
  %v411 = vmul.f32 %v406, %v410
  %412 = vxpose.xlu0.b32.start [1/16] %v411, 128
  %413 = vxpose.xlu0.b32.cont [2/16] 0.0, 128
  %414 = vxpose.xlu0.b32.cont [3/16] 0.0, 128
  %415 = vxpose.xlu0.b32.cont [4/16] 0.0, 128
  %416 = vxpose.xlu0.b32.cont [5/16] 0.0, 128
  %417 = vxpose.xlu0.b32.cont [6/16] 0.0, 128
  %418 = vxpose.xlu0.b32.cont [7/16] 0.0, 128
  %419 = vxpose.xlu0.b32.cont [8/16] 0.0, 128
  %420 = vxpose.xlu0.b32.cont [9/16] 0.0, 128
  %421 = vxpose.xlu0.b32.cont [10/16] 0.0, 128
  %422 = vxpose.xlu0.b32.cont [11/16] 0.0, 128
  %423 = vxpose.xlu0.b32.cont [12/16] 0.0, 128
  %424 = vxpose.xlu0.b32.cont [13/16] 0.0, 128
  %425 = vxpose.xlu0.b32.cont [14/16] 0.0, 128
  %426 = vxpose.xlu0.b32.cont [15/16] 0.0, 128
  %427 = vxpose.xlu0.b32.end [16/16] 0.0, 128
  %v428 = vpop.trf.xlu0
  %v429 = vpop.trf.xlu0
  %v430 = vpop.trf.xlu0
  %v431 = vpop.trf.xlu0
  %v432 = vpop.trf.xlu0
  %v433 = vpop.trf.xlu0
  %v434 = vpop.trf.xlu0
  %v435 = vpop.trf.xlu0
  %v436 = vpop.trf.xlu0
  %v437 = vpop.trf.xlu0
  %v438 = vpop.trf.xlu0
  %v439 = vpop.trf.xlu0
  %v440 = vpop.trf.xlu0
  %v441 = vpop.trf.xlu0
  %v442 = vpop.trf.xlu0
  %v443 = vpop.trf.xlu0
  %444 = vrot.lane.b32.xlu0 %v99, 124
  %v445 = vpop.permute.xlu0 %444
  %v448 = vsel %vm102, %v428, 0
  %450 = vmatprep.subr.mxu0 0.0
  %451 = vmatpush1.msra.mxu0 %v445
  %452 = vmatprep.subr.mxu0 0.0
  %453 = vmatpush1.msra.mxu0 0.0
  %454 = vmatprep.subr.mxu0 0.0
  %455 = vmatpush1.msra.mxu0 0.0
  %456 = vmatprep.subr.mxu0 0.0
  %457 = vmatpush1.msra.mxu0 0.0
  %458 = vmatprep.subr.mxu0 0.0
  %459 = vmatpush1.msra.mxu0 0.0
  %460 = vmatprep.subr.mxu0 0.0
  %461 = vmatpush1.msra.mxu0 0.0
  %462 = vmatprep.subr.mxu0 0.0
  %463 = vmatpush1.msra.mxu0 0.0
  %464 = vmatprep.subr.mxu0 0.0
  %465 = vmatpush1.msra.mxu0 0.0
  %466 = vmatprep.subr.mxu0 0.0
  %467 = vmatpush1.msra.mxu0 0.0
  %468 = vmatprep.subr.mxu0 0.0
  %469 = vmatpush1.msra.mxu0 0.0
  %470 = vmatprep.subr.mxu0 0.0
  %471 = vmatpush1.msra.mxu0 0.0
  %472 = vmatprep.subr.mxu0 0.0
  %473 = vmatpush1.msra.mxu0 0.0
  %474 = vmatprep.subr.mxu0 0.0
  %475 = vmatpush1.msra.mxu0 0.0
  %476 = vmatprep.subr.mxu0 0.0
  %477 = vmatpush1.msra.mxu0 0.0
  %478 = vmatprep.subr.mxu0 0.0
  %479 = vmatpush1.msra.mxu0 0.0
  %480 = vmatprep.subr.mxu0 0.0
  %481 = vmatpush1.msra.mxu0 0.0
  %482 = vmatprep.subr.mxu0 0.0
  %483 = vmatpush1.msra.mxu0 0.0
  %484 = vmatprep.subr.mxu0 0.0
  %485 = vmatpush1.msra.mxu0 0.0
  %486 = vmatprep.subr.mxu0 0.0
  %487 = vmatpush1.msra.mxu0 0.0
  %488 = vmatprep.subr.mxu0 0.0
  %489 = vmatpush1.msra.mxu0 0.0
  %490 = vmatprep.subr.mxu0 0.0
  %491 = vmatpush1.msra.mxu0 0.0
  %492 = vmatprep.subr.mxu0 0.0
  %493 = vmatpush1.msra.mxu0 0.0
  %494 = vmatprep.subr.mxu0 0.0
  %495 = vmatpush1.msra.mxu0 0.0
  %496 = vmatprep.subr.mxu0 0.0
  %497 = vmatpush1.msra.mxu0 0.0
  %498 = vmatprep.subr.mxu0 0.0
  %499 = vmatpush1.msra.mxu0 0.0
  %500 = vmatprep.subr.mxu0 0.0
  %501 = vmatpush1.msra.mxu0 0.0
  %502 = vmatprep.subr.mxu0 0.0
  %503 = vmatpush1.msra.mxu0 0.0
  %504 = vmatprep.subr.mxu0 0.0
  %505 = vmatpush1.msra.mxu0 0.0
  %506 = vmatprep.subr.mxu0 0.0
  %507 = vmatpush1.msra.mxu0 0.0
  %508 = vmatprep.subr.mxu0 0.0
  %509 = vmatpush1.msra.mxu0 0.0
  %510 = vmatprep.subr.mxu0 0.0
  %511 = vmatpush1.msra.mxu0 0.0
  %512 = vmatprep.subr.mxu0 0.0
  %513 = vmatpush1.msra.mxu0 0.0
  %514 = vmatprep.mubr.f32.mxu0 0.0
  %515 = vmatmul.mubr.f32.gmra.mrb[0].mxu0 %v448
  %v516 = vpop.f32.mrb[0].mxu0
  %v517 = vadd.f32 0.0, %v516
  %v518 = vpop.f32.mrb[0].mxu0
  %519 = vdwg.mxu0
  %vm520 = vcmp.gt.f32.partialorder %v517, 0.0
  %v521 = vmul.f32 %v517, 1.442695
  %v522 = vpow.pop %v521
  %v523 = vsub.f32 %v522, 1.0
  %v524 = vsel %vm520, %v517, %v523
  %v526 = vrot.slane %v23, 4
  %vm527 = vcmask 31744
  %v529 = vsel %vm527, %v524, 0
  %vm531 = vcmask 1043456
  %v532 = vsel %vm531, %v526, 0
  %534 = vmatprep.subr.mxu0 0.0
  %535 = vmatpush1.msra.mxu0 %v532
  %536 = vmatprep.subr.mxu0 0.0
  %537 = vmatpush1.msra.mxu0 0.0
  %538 = vmatprep.subr.mxu0 0.0
  %539 = vmatpush1.msra.mxu0 0.0
  %540 = vmatprep.subr.mxu0 0.0
  %541 = vmatpush1.msra.mxu0 0.0
  %542 = vmatprep.subr.mxu0 0.0
  %543 = vmatpush1.msra.mxu0 0.0
  %544 = vmatprep.subr.mxu0 0.0
  %545 = vmatpush1.msra.mxu0 0.0
  %546 = vmatprep.subr.mxu0 0.0
  %547 = vmatpush1.msra.mxu0 0.0
  %548 = vmatprep.subr.mxu0 0.0
  %549 = vmatpush1.msra.mxu0 0.0
  %550 = vmatprep.subr.mxu0 0.0
  %551 = vmatpush1.msra.mxu0 0.0
  %552 = vmatprep.subr.mxu0 0.0
  %553 = vmatpush1.msra.mxu0 0.0
  %554 = vmatprep.subr.mxu0 0.0
  %555 = vmatpush1.msra.mxu0 0.0
  %556 = vmatprep.subr.mxu0 0.0
  %557 = vmatpush1.msra.mxu0 0.0
  %558 = vmatprep.subr.mxu0 0.0
  %559 = vmatpush1.msra.mxu0 0.0
  %560 = vmatprep.subr.mxu0 0.0
  %561 = vmatpush1.msra.mxu0 0.0
  %562 = vmatprep.subr.mxu0 0.0
  %563 = vmatpush1.msra.mxu0 0.0
  %564 = vmatprep.subr.mxu0 0.0
  %565 = vmatpush1.msra.mxu0 0.0
  %566 = vmatprep.subr.mxu0 0.0
  %567 = vmatpush1.msra.mxu0 0.0
  %568 = vmatprep.subr.mxu0 0.0
  %569 = vmatpush1.msra.mxu0 0.0
  %570 = vmatprep.subr.mxu0 0.0
  %571 = vmatpush1.msra.mxu0 0.0
  %572 = vmatprep.subr.mxu0 0.0
  %573 = vmatpush1.msra.mxu0 0.0
  %574 = vmatprep.subr.mxu0 0.0
  %575 = vmatpush1.msra.mxu0 0.0
  %576 = vmatprep.subr.mxu0 0.0
  %577 = vmatpush1.msra.mxu0 0.0
  %578 = vmatprep.subr.mxu0 0.0
  %579 = vmatpush1.msra.mxu0 0.0
  %580 = vmatprep.subr.mxu0 0.0
  %581 = vmatpush1.msra.mxu0 0.0
  %582 = vmatprep.subr.mxu0 0.0
  %583 = vmatpush1.msra.mxu0 0.0
  %584 = vmatprep.subr.mxu0 0.0
  %585 = vmatpush1.msra.mxu0 0.0
  %586 = vmatprep.subr.mxu0 0.0
  %587 = vmatpush1.msra.mxu0 0.0
  %588 = vmatprep.subr.mxu0 0.0
  %589 = vmatpush1.msra.mxu0 0.0
  %590 = vmatprep.subr.mxu0 0.0
  %591 = vmatpush1.msra.mxu0 0.0
  %592 = vmatprep.subr.mxu0 0.0
  %593 = vmatpush1.msra.mxu0 0.0
  %594 = vmatprep.subr.mxu0 0.0
  %595 = vmatpush1.msra.mxu0 0.0
  %596 = vmatprep.subr.mxu0 0.0
  %597 = vmatpush1.msra.mxu0 0.0
  %598 = vmatprep.mubr.f32.mxu0 0.0
  %599 = vmatmul.mubr.f32.gmra.mrb[0].mxu0 %v529
  %v600 = vpop.f32.mrb[0].mxu0
  %v601 = vadd.f32 0.0, %v600
  %v602 = vpop.f32.mrb[0].mxu0
  %603 = vdwg.mxu0
  %v605 = vsel %vm527, %v386, 0
  %v607 = vsel %vm531, %v23, 0
  %609 = vmatprep.subr.mxu0 0.0
  %610 = vmatpush1.msra.mxu0 %v607
  %611 = vmatprep.subr.mxu0 0.0
  %612 = vmatpush1.msra.mxu0 0.0
  %613 = vmatprep.subr.mxu0 0.0
  %614 = vmatpush1.msra.mxu0 0.0
  %615 = vmatprep.subr.mxu0 0.0
  %616 = vmatpush1.msra.mxu0 0.0
  %617 = vmatprep.subr.mxu0 0.0
  %618 = vmatpush1.msra.mxu0 0.0
  %619 = vmatprep.subr.mxu0 0.0
  %620 = vmatpush1.msra.mxu0 0.0
  %621 = vmatprep.subr.mxu0 0.0
  %622 = vmatpush1.msra.mxu0 0.0
  %623 = vmatprep.subr.mxu0 0.0
  %624 = vmatpush1.msra.mxu0 0.0
  %625 = vmatprep.subr.mxu0 0.0
  %626 = vmatpush1.msra.mxu0 0.0
  %627 = vmatprep.subr.mxu0 0.0
  %628 = vmatpush1.msra.mxu0 0.0
  %629 = vmatprep.subr.mxu0 0.0
  %630 = vmatpush1.msra.mxu0 0.0
  %631 = vmatprep.subr.mxu0 0.0
  %632 = vmatpush1.msra.mxu0 0.0
  %633 = vmatprep.subr.mxu0 0.0
  %634 = vmatpush1.msra.mxu0 0.0
  %635 = vmatprep.subr.mxu0 0.0
  %636 = vmatpush1.msra.mxu0 0.0
  %637 = vmatprep.subr.mxu0 0.0
  %638 = vmatpush1.msra.mxu0 0.0
  %639 = vmatprep.subr.mxu0 0.0
  %640 = vmatpush1.msra.mxu0 0.0
  %641 = vmatprep.subr.mxu0 0.0
  %642 = vmatpush1.msra.mxu0 0.0
  %643 = vmatprep.subr.mxu0 0.0
  %644 = vmatpush1.msra.mxu0 0.0
  %645 = vmatprep.subr.mxu0 0.0
  %646 = vmatpush1.msra.mxu0 0.0
  %647 = vmatprep.subr.mxu0 0.0
  %648 = vmatpush1.msra.mxu0 0.0
  %649 = vmatprep.subr.mxu0 0.0
  %650 = vmatpush1.msra.mxu0 0.0
  %651 = vmatprep.subr.mxu0 0.0
  %652 = vmatpush1.msra.mxu0 0.0
  %653 = vmatprep.subr.mxu0 0.0
  %654 = vmatpush1.msra.mxu0 0.0
  %655 = vmatprep.subr.mxu0 0.0
  %656 = vmatpush1.msra.mxu0 0.0
  %657 = vmatprep.subr.mxu0 0.0
  %658 = vmatpush1.msra.mxu0 0.0
  %659 = vmatprep.subr.mxu0 0.0
  %660 = vmatpush1.msra.mxu0 0.0
  %661 = vmatprep.subr.mxu0 0.0
  %662 = vmatpush1.msra.mxu0 0.0
  %663 = vmatprep.subr.mxu0 0.0
  %664 = vmatpush1.msra.mxu0 0.0
  %665 = vmatprep.subr.mxu0 0.0
  %666 = vmatpush1.msra.mxu0 0.0
  %667 = vmatprep.subr.mxu0 0.0
  %668 = vmatpush1.msra.mxu0 0.0
  %669 = vmatprep.subr.mxu0 0.0
  %670 = vmatpush1.msra.mxu0 0.0
  %671 = vmatprep.subr.mxu0 0.0
  %672 = vmatpush1.msra.mxu0 0.0
  %673 = vmatprep.mubr.f32.mxu0 0.0
  %674 = vmatmul.mubr.f32.gmra.mrb[0].mxu0 %v605
  %v675 = vpop.f32.mrb[0].mxu0
  %v676 = vadd.f32 %v601, %v675
  %v677 = vpop.f32.mrb[0].mxu0
  %678 = vdwg.mxu0
  %v679 = vld [vmem:[%s1] sm:$0xff]
  %v680 = vld [vmem:[%s3 + $0x28] sm:$0xff]
  %682 = vrot.lane.b32.xlu0 %v19, 120
  %v683 = vpop.permute.xlu0 %682
  %684 = vrot.lane.b32.xlu0 %v20, 120
  %v685 = vpop.permute.xlu0 %684
  %v688 = vsel %vm24, %v679, 0
  %v690 = vsel %vm28, %v685, 0
  %692 = vmatprep.subr.mxu0 0.0
  %693 = vmatpush1.msra.mxu0 %v683
  %694 = vmatprep.subr.mxu0 0.0
  %695 = vmatpush1.msra.mxu0 %v690
  %696 = vmatprep.subr.mxu0 0.0
  %697 = vmatpush1.msra.mxu0 0.0
  %698 = vmatprep.subr.mxu0 0.0
  %699 = vmatpush1.msra.mxu0 0.0
  %700 = vmatprep.subr.mxu0 0.0
  %701 = vmatpush1.msra.mxu0 0.0
  %702 = vmatprep.subr.mxu0 0.0
  %703 = vmatpush1.msra.mxu0 0.0
  %704 = vmatprep.subr.mxu0 0.0
  %705 = vmatpush1.msra.mxu0 0.0
  %706 = vmatprep.subr.mxu0 0.0
  %707 = vmatpush1.msra.mxu0 0.0
  %708 = vmatprep.subr.mxu0 0.0
  %709 = vmatpush1.msra.mxu0 0.0
  %710 = vmatprep.subr.mxu0 0.0
  %711 = vmatpush1.msra.mxu0 0.0
  %712 = vmatprep.subr.mxu0 0.0
  %713 = vmatpush1.msra.mxu0 0.0
  %714 = vmatprep.subr.mxu0 0.0
  %715 = vmatpush1.msra.mxu0 0.0
  %716 = vmatprep.subr.mxu0 0.0
  %717 = vmatpush1.msra.mxu0 0.0
  %718 = vmatprep.subr.mxu0 0.0
  %719 = vmatpush1.msra.mxu0 0.0
  %720 = vmatprep.subr.mxu0 0.0
  %721 = vmatpush1.msra.mxu0 0.0
  %722 = vmatprep.subr.mxu0 0.0
  %723 = vmatpush1.msra.mxu0 0.0
  %724 = vmatprep.subr.mxu0 0.0
  %725 = vmatpush1.msra.mxu0 0.0
  %726 = vmatprep.subr.mxu0 0.0
  %727 = vmatpush1.msra.mxu0 0.0
  %728 = vmatprep.subr.mxu0 0.0
  %729 = vmatpush1.msra.mxu0 0.0
  %730 = vmatprep.subr.mxu0 0.0
  %731 = vmatpush1.msra.mxu0 0.0
  %732 = vmatprep.subr.mxu0 0.0
  %733 = vmatpush1.msra.mxu0 0.0
  %734 = vmatprep.subr.mxu0 0.0
  %735 = vmatpush1.msra.mxu0 0.0
  %736 = vmatprep.subr.mxu0 0.0
  %737 = vmatpush1.msra.mxu0 0.0
  %738 = vmatprep.subr.mxu0 0.0
  %739 = vmatpush1.msra.mxu0 0.0
  %740 = vmatprep.subr.mxu0 0.0
  %741 = vmatpush1.msra.mxu0 0.0
  %742 = vmatprep.subr.mxu0 0.0
  %743 = vmatpush1.msra.mxu0 0.0
  %744 = vmatprep.subr.mxu0 0.0
  %745 = vmatpush1.msra.mxu0 0.0
  %746 = vmatprep.subr.mxu0 0.0
  %747 = vmatpush1.msra.mxu0 0.0
  %748 = vmatprep.subr.mxu0 0.0
  %749 = vmatpush1.msra.mxu0 0.0
  %750 = vmatprep.subr.mxu0 0.0
  %751 = vmatpush1.msra.mxu0 0.0
  %752 = vmatprep.subr.mxu0 0.0
  %753 = vmatpush1.msra.mxu0 0.0
  %754 = vmatprep.subr.mxu0 0.0
  %755 = vmatpush1.msra.mxu0 0.0
  %756 = vmatprep.mubr.f32.mxu0 0.0
  %757 = vmatmul.mubr.f32.gmra.mrb[0].mxu0 %v688
  %v758 = vpop.f32.mrb[0].mxu0
  %v759 = vadd.f32 0.0, %v758
  %v760 = vpop.f32.mrb[0].mxu0
  %761 = vdwg.mxu0
  %763 = vrot.lane.b32.xlu0 %v21, 126
  %v764 = vpop.permute.xlu0 %763
  %v767 = vsel %vm102, %v759, 0
  %769 = vmatprep.subr.mxu0 0.0
  %770 = vmatpush1.msra.mxu0 %v764
  %771 = vmatprep.subr.mxu0 0.0
  %772 = vmatpush1.msra.mxu0 0.0
  %773 = vmatprep.subr.mxu0 0.0
  %774 = vmatpush1.msra.mxu0 0.0
  %775 = vmatprep.subr.mxu0 0.0
  %776 = vmatpush1.msra.mxu0 0.0
  %777 = vmatprep.subr.mxu0 0.0
  %778 = vmatpush1.msra.mxu0 0.0
  %779 = vmatprep.subr.mxu0 0.0
  %780 = vmatpush1.msra.mxu0 0.0
  %781 = vmatprep.subr.mxu0 0.0
  %782 = vmatpush1.msra.mxu0 0.0
  %783 = vmatprep.subr.mxu0 0.0
  %784 = vmatpush1.msra.mxu0 0.0
  %785 = vmatprep.subr.mxu0 0.0
  %786 = vmatpush1.msra.mxu0 0.0
  %787 = vmatprep.subr.mxu0 0.0
  %788 = vmatpush1.msra.mxu0 0.0
  %789 = vmatprep.subr.mxu0 0.0
  %790 = vmatpush1.msra.mxu0 0.0
  %791 = vmatprep.subr.mxu0 0.0
  %792 = vmatpush1.msra.mxu0 0.0
  %793 = vmatprep.subr.mxu0 0.0
  %794 = vmatpush1.msra.mxu0 0.0
  %795 = vmatprep.subr.mxu0 0.0
  %796 = vmatpush1.msra.mxu0 0.0
  %797 = vmatprep.subr.mxu0 0.0
  %798 = vmatpush1.msra.mxu0 0.0
  %799 = vmatprep.subr.mxu0 0.0
  %800 = vmatpush1.msra.mxu0 0.0
  %801 = vmatprep.subr.mxu0 0.0
  %802 = vmatpush1.msra.mxu0 0.0
  %803 = vmatprep.subr.mxu0 0.0
  %804 = vmatpush1.msra.mxu0 0.0
  %805 = vmatprep.subr.mxu0 0.0
  %806 = vmatpush1.msra.mxu0 0.0
  %807 = vmatprep.subr.mxu0 0.0
  %808 = vmatpush1.msra.mxu0 0.0
  %809 = vmatprep.subr.mxu0 0.0
  %810 = vmatpush1.msra.mxu0 0.0
  %811 = vmatprep.subr.mxu0 0.0
  %812 = vmatpush1.msra.mxu0 0.0
  %813 = vmatprep.subr.mxu0 0.0
  %814 = vmatpush1.msra.mxu0 0.0
  %815 = vmatprep.subr.mxu0 0.0
  %816 = vmatpush1.msra.mxu0 0.0
  %817 = vmatprep.subr.mxu0 0.0
  %818 = vmatpush1.msra.mxu0 0.0
  %819 = vmatprep.subr.mxu0 0.0
  %820 = vmatpush1.msra.mxu0 0.0
  %821 = vmatprep.subr.mxu0 0.0
  %822 = vmatpush1.msra.mxu0 0.0
  %823 = vmatprep.subr.mxu0 0.0
  %824 = vmatpush1.msra.mxu0 0.0
  %825 = vmatprep.subr.mxu0 0.0
  %826 = vmatpush1.msra.mxu0 0.0
  %827 = vmatprep.subr.mxu0 0.0
  %828 = vmatpush1.msra.mxu0 0.0
  %829 = vmatprep.subr.mxu0 0.0
  %830 = vmatpush1.msra.mxu0 0.0
  %831 = vmatprep.subr.mxu0 0.0
  %832 = vmatpush1.msra.mxu0 0.0
  %833 = vmatprep.mubr.f32.mxu0 0.0
  %834 = vmatmul.mubr.f32.gmra.mrb[0].mxu0 %v767
  %v835 = vpop.f32.mrb[0].mxu0
  %v836 = vadd.f32 0.0, %v835
  %v837 = vpop.f32.mrb[0].mxu0
  %838 = vdwg.mxu0
  %839 = vrot.lane.b32.xlu0 %v22, 120
  %v840 = vpop.permute.xlu0 %839
  %v841 = vsel %vm102, %v840, 0
  %843 = vmatprep.subr.mxu0 0.0
  %844 = vmatpush1.xpose.msra.mxu0 %v767
  %845 = vmatprep.subr.mxu0 0.0
  %846 = vmatpush1.xpose.msra.mxu0 0.0
  %847 = vmatprep.subr.mxu0 0.0
  %848 = vmatpush1.xpose.msra.mxu0 0.0
  %849 = vmatprep.subr.mxu0 0.0
  %850 = vmatpush1.xpose.msra.mxu0 0.0
  %851 = vmatprep.subr.mxu0 0.0
  %852 = vmatpush1.xpose.msra.mxu0 0.0
  %853 = vmatprep.subr.mxu0 0.0
  %854 = vmatpush1.xpose.msra.mxu0 0.0
  %855 = vmatprep.subr.mxu0 0.0
  %856 = vmatpush1.xpose.msra.mxu0 0.0
  %857 = vmatprep.subr.mxu0 0.0
  %858 = vmatpush1.xpose.msra.mxu0 0.0
  %859 = vmatprep.subr.mxu0 0.0
  %860 = vmatpush1.xpose.msra.mxu0 0.0
  %861 = vmatprep.subr.mxu0 0.0
  %862 = vmatpush1.xpose.msra.mxu0 0.0
  %863 = vmatprep.subr.mxu0 0.0
  %864 = vmatpush1.xpose.msra.mxu0 0.0
  %865 = vmatprep.subr.mxu0 0.0
  %866 = vmatpush1.xpose.msra.mxu0 0.0
  %867 = vmatprep.subr.mxu0 0.0
  %868 = vmatpush1.xpose.msra.mxu0 0.0
  %869 = vmatprep.subr.mxu0 0.0
  %870 = vmatpush1.xpose.msra.mxu0 0.0
  %871 = vmatprep.subr.mxu0 0.0
  %872 = vmatpush1.xpose.msra.mxu0 0.0
  %873 = vmatprep.subr.mxu0 0.0
  %874 = vmatpush1.xpose.msra.mxu0 0.0
  %875 = vmatprep.subr.mxu0 0.0
  %876 = vmatpush1.xpose.msra.mxu0 0.0
  %877 = vmatprep.subr.mxu0 0.0
  %878 = vmatpush1.xpose.msra.mxu0 0.0
  %879 = vmatprep.subr.mxu0 0.0
  %880 = vmatpush1.xpose.msra.mxu0 0.0
  %881 = vmatprep.subr.mxu0 0.0
  %882 = vmatpush1.xpose.msra.mxu0 0.0
  %883 = vmatprep.subr.mxu0 0.0
  %884 = vmatpush1.xpose.msra.mxu0 0.0
  %885 = vmatprep.subr.mxu0 0.0
  %886 = vmatpush1.xpose.msra.mxu0 0.0
  %887 = vmatprep.subr.mxu0 0.0
  %888 = vmatpush1.xpose.msra.mxu0 0.0
  %889 = vmatprep.subr.mxu0 0.0
  %890 = vmatpush1.xpose.msra.mxu0 0.0
  %891 = vmatprep.subr.mxu0 0.0
  %892 = vmatpush1.xpose.msra.mxu0 0.0
  %893 = vmatprep.subr.mxu0 0.0
  %894 = vmatpush1.xpose.msra.mxu0 0.0
  %895 = vmatprep.subr.mxu0 0.0
  %896 = vmatpush1.xpose.msra.mxu0 0.0
  %897 = vmatprep.subr.mxu0 0.0
  %898 = vmatpush1.xpose.msra.mxu0 0.0
  %899 = vmatprep.subr.mxu0 0.0
  %900 = vmatpush1.xpose.msra.mxu0 0.0
  %901 = vmatprep.subr.mxu0 0.0
  %902 = vmatpush1.xpose.msra.mxu0 0.0
  %903 = vmatprep.subr.mxu0 0.0
  %904 = vmatpush1.xpose.msra.mxu0 0.0
  %905 = vmatprep.subr.mxu0 0.0
  %906 = vmatpush1.xpose.msra.mxu0 0.0
  %907 = vmatprep.mubr.f32.mxu0 0.0
  %908 = vmatmul.mubr.f32.gmra.mrb[0].mxu0 %v841
  %v909 = vpop.f32.mrb[0].mxu0
  %v910 = vadd.f32 0.0, %v909
  %v911 = vpop.f32.mrb[0].mxu0
  %912 = vdwg.mxu0
  %914 = vset.pattern.permute.xlu0 0
  %915 = vperm.xlu0 %914, %v836
  %v916 = vpop.permute.xlu0 %915
  %v918 = vlaneseq
  %v919 = vshrl.u32 %v918, 7
  %v920 = vsub.s32 0, %v919
  %v921 = vrot.slane %v910, %v920
  %v922 = vadd.f32 %v916, %v921
  %vm923 = vcmp.gt.f32.partialorder %v922, 0.0
  %v924 = vmul.f32 %v922, 0.2
  %v925 = vsel %vm923, %v922, %v924
  %v926 = vsel %vm263, %v925, 0.0
  %v927 = vsel %vm262, %v926, -30.0
  %v928 = vsel %vm102, %v927, -inf
  %929 = vmax.xlane.f32.xlu0 %v928
  %v930 = vpop.xlane.xlu0 %929
  %v931 = vsub.f32 %v927, %v930
  %v932 = vmul.f32 %v931, 1.442695
  %v933 = vpow.pop %v932
  %v934 = vsel %vm102, %v933, 0.0
  %935 = vadd.xlane.f32.xlu0 %v934
  %v936 = vpop.xlane.xlu0 %935
  %v937 = vrcp.pop %v936
  %v938 = vmul.f32 %v933, %v937
  %939 = vxpose.xlu0.b32.start [1/16] %v938, 128
  %940 = vxpose.xlu0.b32.cont [2/16] 0.0, 128
  %941 = vxpose.xlu0.b32.cont [3/16] 0.0, 128
  %942 = vxpose.xlu0.b32.cont [4/16] 0.0, 128
  %943 = vxpose.xlu0.b32.cont [5/16] 0.0, 128
  %944 = vxpose.xlu0.b32.cont [6/16] 0.0, 128
  %945 = vxpose.xlu0.b32.cont [7/16] 0.0, 128
  %946 = vxpose.xlu0.b32.cont [8/16] 0.0, 128
  %947 = vxpose.xlu0.b32.cont [9/16] 0.0, 128
  %948 = vxpose.xlu0.b32.cont [10/16] 0.0, 128
  %949 = vxpose.xlu0.b32.cont [11/16] 0.0, 128
  %950 = vxpose.xlu0.b32.cont [12/16] 0.0, 128
  %951 = vxpose.xlu0.b32.cont [13/16] 0.0, 128
  %952 = vxpose.xlu0.b32.cont [14/16] 0.0, 128
  %953 = vxpose.xlu0.b32.cont [15/16] 0.0, 128
  %954 = vxpose.xlu0.b32.end [16/16] 0.0, 128
  %v955 = vpop.trf.xlu0
  %v956 = vpop.trf.xlu0
  %v957 = vpop.trf.xlu0
  %v958 = vpop.trf.xlu0
  %v959 = vpop.trf.xlu0
  %v960 = vpop.trf.xlu0
  %v961 = vpop.trf.xlu0
  %v962 = vpop.trf.xlu0
  %v963 = vpop.trf.xlu0
  %v964 = vpop.trf.xlu0
  %v965 = vpop.trf.xlu0
  %v966 = vpop.trf.xlu0
  %v967 = vpop.trf.xlu0
  %v968 = vpop.trf.xlu0
  %v969 = vpop.trf.xlu0
  %v970 = vpop.trf.xlu0
  %v972 = vsel %vm102, %v955, 0
  %974 = vmatprep.subr.mxu0 0.0
  %975 = vmatpush1.msra.mxu0 %v759
  %976 = vmatprep.subr.mxu0 0.0
  %977 = vmatpush1.msra.mxu0 0.0
  %978 = vmatprep.subr.mxu0 0.0
  %979 = vmatpush1.msra.mxu0 0.0
  %980 = vmatprep.subr.mxu0 0.0
  %981 = vmatpush1.msra.mxu0 0.0
  %982 = vmatprep.subr.mxu0 0.0
  %983 = vmatpush1.msra.mxu0 0.0
  %984 = vmatprep.subr.mxu0 0.0
  %985 = vmatpush1.msra.mxu0 0.0
  %986 = vmatprep.subr.mxu0 0.0
  %987 = vmatpush1.msra.mxu0 0.0
  %988 = vmatprep.subr.mxu0 0.0
  %989 = vmatpush1.msra.mxu0 0.0
  %990 = vmatprep.subr.mxu0 0.0
  %991 = vmatpush1.msra.mxu0 0.0
  %992 = vmatprep.subr.mxu0 0.0
  %993 = vmatpush1.msra.mxu0 0.0
  %994 = vmatprep.subr.mxu0 0.0
  %995 = vmatpush1.msra.mxu0 0.0
  %996 = vmatprep.subr.mxu0 0.0
  %997 = vmatpush1.msra.mxu0 0.0
  %998 = vmatprep.subr.mxu0 0.0
  %999 = vmatpush1.msra.mxu0 0.0
  %1000 = vmatprep.subr.mxu0 0.0
  %1001 = vmatpush1.msra.mxu0 0.0
  %1002 = vmatprep.subr.mxu0 0.0
  %1003 = vmatpush1.msra.mxu0 0.0
  %1004 = vmatprep.subr.mxu0 0.0
  %1005 = vmatpush1.msra.mxu0 0.0
  %1006 = vmatprep.subr.mxu0 0.0
  %1007 = vmatpush1.msra.mxu0 0.0
  %1008 = vmatprep.subr.mxu0 0.0
  %1009 = vmatpush1.msra.mxu0 0.0
  %1010 = vmatprep.subr.mxu0 0.0
  %1011 = vmatpush1.msra.mxu0 0.0
  %1012 = vmatprep.subr.mxu0 0.0
  %1013 = vmatpush1.msra.mxu0 0.0
  %1014 = vmatprep.subr.mxu0 0.0
  %1015 = vmatpush1.msra.mxu0 0.0
  %1016 = vmatprep.subr.mxu0 0.0
  %1017 = vmatpush1.msra.mxu0 0.0
  %1018 = vmatprep.subr.mxu0 0.0
  %1019 = vmatpush1.msra.mxu0 0.0
  %1020 = vmatprep.subr.mxu0 0.0
  %1021 = vmatpush1.msra.mxu0 0.0
  %1022 = vmatprep.subr.mxu0 0.0
  %1023 = vmatpush1.msra.mxu0 0.0
  %1024 = vmatprep.subr.mxu0 0.0
  %1025 = vmatpush1.msra.mxu0 0.0
  %1026 = vmatprep.subr.mxu0 0.0
  %1027 = vmatpush1.msra.mxu0 0.0
  %1028 = vmatprep.subr.mxu0 0.0
  %1029 = vmatpush1.msra.mxu0 0.0
  %1030 = vmatprep.subr.mxu0 0.0
  %1031 = vmatpush1.msra.mxu0 0.0
  %1032 = vmatprep.subr.mxu0 0.0
  %1033 = vmatpush1.msra.mxu0 0.0
  %1034 = vmatprep.subr.mxu0 0.0
  %1035 = vmatpush1.msra.mxu0 0.0
  %1036 = vmatprep.subr.mxu0 0.0
  %1037 = vmatpush1.msra.mxu0 0.0
  %1038 = vmatprep.mubr.f32.mxu0 0.0
  %1039 = vmatmul.mubr.f32.gmra.mrb[0].mxu0 %v972
  %v1040 = vpop.f32.mrb[0].mxu0
  %v1041 = vadd.f32 0.0, %v1040
  %v1042 = vpop.f32.mrb[0].mxu0
  %1043 = vdwg.mxu0
  %vm1044 = vcmp.gt.f32.partialorder %v1041, 0.0
  %v1045 = vmul.f32 %v1041, 1.442695
  %v1046 = vpow.pop %v1045
  %v1047 = vsub.f32 %v1046, 1.0
  %v1048 = vsel %vm1044, %v1041, %v1047
  %1049 = vset.pattern.permute.xlu0 1
  %1050 = vperm.xlu0 %1049, %v836
  %v1051 = vpop.permute.xlu0 %1050
  %v1053 = vlaneseq
  %v1054 = vshrl.u32 %v1053, 7
  %v1055 = vsub.s32 1, %v1054
  %v1056 = vrot.slane %v910, %v1055
  %v1057 = vadd.f32 %v1051, %v1056
  %vm1058 = vcmp.gt.f32.partialorder %v1057, 0.0
  %v1059 = vmul.f32 %v1057, 0.2
  %v1060 = vsel %vm1058, %v1057, %v1059
  %v1061 = vsel %vm263, %v1060, 0.0
  %v1062 = vsel %vm262, %v1061, -30.0
  %v1063 = vsel %vm102, %v1062, -inf
  %1064 = vmax.xlane.f32.xlu0 %v1063
  %v1065 = vpop.xlane.xlu0 %1064
  %v1066 = vsub.f32 %v1062, %v1065
  %v1067 = vmul.f32 %v1066, 1.442695
  %v1068 = vpow.pop %v1067
  %v1069 = vsel %vm102, %v1068, 0.0
  %1070 = vadd.xlane.f32.xlu0 %v1069
  %v1071 = vpop.xlane.xlu0 %1070
  %v1072 = vrcp.pop %v1071
  %v1073 = vmul.f32 %v1068, %v1072
  %1074 = vxpose.xlu0.b32.start [1/16] %v1073, 128
  %1075 = vxpose.xlu0.b32.cont [2/16] 0.0, 128
  %1076 = vxpose.xlu0.b32.cont [3/16] 0.0, 128
  %1077 = vxpose.xlu0.b32.cont [4/16] 0.0, 128
  %1078 = vxpose.xlu0.b32.cont [5/16] 0.0, 128
  %1079 = vxpose.xlu0.b32.cont [6/16] 0.0, 128
  %1080 = vxpose.xlu0.b32.cont [7/16] 0.0, 128
  %1081 = vxpose.xlu0.b32.cont [8/16] 0.0, 128
  %1082 = vxpose.xlu0.b32.cont [9/16] 0.0, 128
  %1083 = vxpose.xlu0.b32.cont [10/16] 0.0, 128
  %1084 = vxpose.xlu0.b32.cont [11/16] 0.0, 128
  %1085 = vxpose.xlu0.b32.cont [12/16] 0.0, 128
  %1086 = vxpose.xlu0.b32.cont [13/16] 0.0, 128
  %1087 = vxpose.xlu0.b32.cont [14/16] 0.0, 128
  %1088 = vxpose.xlu0.b32.cont [15/16] 0.0, 128
  %1089 = vxpose.xlu0.b32.end [16/16] 0.0, 128
  %v1090 = vpop.trf.xlu0
  %v1091 = vpop.trf.xlu0
  %v1092 = vpop.trf.xlu0
  %v1093 = vpop.trf.xlu0
  %v1094 = vpop.trf.xlu0
  %v1095 = vpop.trf.xlu0
  %v1096 = vpop.trf.xlu0
  %v1097 = vpop.trf.xlu0
  %v1098 = vpop.trf.xlu0
  %v1099 = vpop.trf.xlu0
  %v1100 = vpop.trf.xlu0
  %v1101 = vpop.trf.xlu0
  %v1102 = vpop.trf.xlu0
  %v1103 = vpop.trf.xlu0
  %v1104 = vpop.trf.xlu0
  %v1105 = vpop.trf.xlu0
  %1106 = vrot.lane.b32.xlu0 %v759, 124
  %v1107 = vpop.permute.xlu0 %1106
  %v1110 = vsel %vm102, %v1090, 0
  %1112 = vmatprep.subr.mxu0 0.0
  %1113 = vmatpush1.msra.mxu0 %v1107
  %1114 = vmatprep.subr.mxu0 0.0
  %1115 = vmatpush1.msra.mxu0 0.0
  %1116 = vmatprep.subr.mxu0 0.0
  %1117 = vmatpush1.msra.mxu0 0.0
  %1118 = vmatprep.subr.mxu0 0.0
  %1119 = vmatpush1.msra.mxu0 0.0
  %1120 = vmatprep.subr.mxu0 0.0
  %1121 = vmatpush1.msra.mxu0 0.0
  %1122 = vmatprep.subr.mxu0 0.0
  %1123 = vmatpush1.msra.mxu0 0.0
  %1124 = vmatprep.subr.mxu0 0.0
  %1125 = vmatpush1.msra.mxu0 0.0
  %1126 = vmatprep.subr.mxu0 0.0
  %1127 = vmatpush1.msra.mxu0 0.0
  %1128 = vmatprep.subr.mxu0 0.0
  %1129 = vmatpush1.msra.mxu0 0.0
  %1130 = vmatprep.subr.mxu0 0.0
  %1131 = vmatpush1.msra.mxu0 0.0
  %1132 = vmatprep.subr.mxu0 0.0
  %1133 = vmatpush1.msra.mxu0 0.0
  %1134 = vmatprep.subr.mxu0 0.0
  %1135 = vmatpush1.msra.mxu0 0.0
  %1136 = vmatprep.subr.mxu0 0.0
  %1137 = vmatpush1.msra.mxu0 0.0
  %1138 = vmatprep.subr.mxu0 0.0
  %1139 = vmatpush1.msra.mxu0 0.0
  %1140 = vmatprep.subr.mxu0 0.0
  %1141 = vmatpush1.msra.mxu0 0.0
  %1142 = vmatprep.subr.mxu0 0.0
  %1143 = vmatpush1.msra.mxu0 0.0
  %1144 = vmatprep.subr.mxu0 0.0
  %1145 = vmatpush1.msra.mxu0 0.0
  %1146 = vmatprep.subr.mxu0 0.0
  %1147 = vmatpush1.msra.mxu0 0.0
  %1148 = vmatprep.subr.mxu0 0.0
  %1149 = vmatpush1.msra.mxu0 0.0
  %1150 = vmatprep.subr.mxu0 0.0
  %1151 = vmatpush1.msra.mxu0 0.0
  %1152 = vmatprep.subr.mxu0 0.0
  %1153 = vmatpush1.msra.mxu0 0.0
  %1154 = vmatprep.subr.mxu0 0.0
  %1155 = vmatpush1.msra.mxu0 0.0
  %1156 = vmatprep.subr.mxu0 0.0
  %1157 = vmatpush1.msra.mxu0 0.0
  %1158 = vmatprep.subr.mxu0 0.0
  %1159 = vmatpush1.msra.mxu0 0.0
  %1160 = vmatprep.subr.mxu0 0.0
  %1161 = vmatpush1.msra.mxu0 0.0
  %1162 = vmatprep.subr.mxu0 0.0
  %1163 = vmatpush1.msra.mxu0 0.0
  %1164 = vmatprep.subr.mxu0 0.0
  %1165 = vmatpush1.msra.mxu0 0.0
  %1166 = vmatprep.subr.mxu0 0.0
  %1167 = vmatpush1.msra.mxu0 0.0
  %1168 = vmatprep.subr.mxu0 0.0
  %1169 = vmatpush1.msra.mxu0 0.0
  %1170 = vmatprep.subr.mxu0 0.0
  %1171 = vmatpush1.msra.mxu0 0.0
  %1172 = vmatprep.subr.mxu0 0.0
  %1173 = vmatpush1.msra.mxu0 0.0
  %1174 = vmatprep.subr.mxu0 0.0
  %1175 = vmatpush1.msra.mxu0 0.0
  %1176 = vmatprep.mubr.f32.mxu0 0.0
  %1177 = vmatmul.mubr.f32.gmra.mrb[0].mxu0 %v1110
  %v1178 = vpop.f32.mrb[0].mxu0
  %v1179 = vadd.f32 0.0, %v1178
  %v1180 = vpop.f32.mrb[0].mxu0
  %1181 = vdwg.mxu0
  %vm1182 = vcmp.gt.f32.partialorder %v1179, 0.0
  %v1183 = vmul.f32 %v1179, 1.442695
  %v1184 = vpow.pop %v1183
  %v1185 = vsub.f32 %v1184, 1.0
  %v1186 = vsel %vm1182, %v1179, %v1185
  %v1188 = vrot.slane %v680, 4
  %v1190 = vsel %vm527, %v1186, 0
  %v1192 = vsel %vm531, %v1188, 0
  %1194 = vmatprep.subr.mxu0 0.0
  %1195 = vmatpush1.msra.mxu0 %v1192
  %1196 = vmatprep.subr.mxu0 0.0
  %1197 = vmatpush1.msra.mxu0 0.0
  %1198 = vmatprep.subr.mxu0 0.0
  %1199 = vmatpush1.msra.mxu0 0.0
  %1200 = vmatprep.subr.mxu0 0.0
  %1201 = vmatpush1.msra.mxu0 0.0
  %1202 = vmatprep.subr.mxu0 0.0
  %1203 = vmatpush1.msra.mxu0 0.0
  %1204 = vmatprep.subr.mxu0 0.0
  %1205 = vmatpush1.msra.mxu0 0.0
  %1206 = vmatprep.subr.mxu0 0.0
  %1207 = vmatpush1.msra.mxu0 0.0
  %1208 = vmatprep.subr.mxu0 0.0
  %1209 = vmatpush1.msra.mxu0 0.0
  %1210 = vmatprep.subr.mxu0 0.0
  %1211 = vmatpush1.msra.mxu0 0.0
  %1212 = vmatprep.subr.mxu0 0.0
  %1213 = vmatpush1.msra.mxu0 0.0
  %1214 = vmatprep.subr.mxu0 0.0
  %1215 = vmatpush1.msra.mxu0 0.0
  %1216 = vmatprep.subr.mxu0 0.0
  %1217 = vmatpush1.msra.mxu0 0.0
  %1218 = vmatprep.subr.mxu0 0.0
  %1219 = vmatpush1.msra.mxu0 0.0
  %1220 = vmatprep.subr.mxu0 0.0
  %1221 = vmatpush1.msra.mxu0 0.0
  %1222 = vmatprep.subr.mxu0 0.0
  %1223 = vmatpush1.msra.mxu0 0.0
  %1224 = vmatprep.subr.mxu0 0.0
  %1225 = vmatpush1.msra.mxu0 0.0
  %1226 = vmatprep.subr.mxu0 0.0
  %1227 = vmatpush1.msra.mxu0 0.0
  %1228 = vmatprep.subr.mxu0 0.0
  %1229 = vmatpush1.msra.mxu0 0.0
  %1230 = vmatprep.subr.mxu0 0.0
  %1231 = vmatpush1.msra.mxu0 0.0
  %1232 = vmatprep.subr.mxu0 0.0
  %1233 = vmatpush1.msra.mxu0 0.0
  %1234 = vmatprep.subr.mxu0 0.0
  %1235 = vmatpush1.msra.mxu0 0.0
  %1236 = vmatprep.subr.mxu0 0.0
  %1237 = vmatpush1.msra.mxu0 0.0
  %1238 = vmatprep.subr.mxu0 0.0
  %1239 = vmatpush1.msra.mxu0 0.0
  %1240 = vmatprep.subr.mxu0 0.0
  %1241 = vmatpush1.msra.mxu0 0.0
  %1242 = vmatprep.subr.mxu0 0.0
  %1243 = vmatpush1.msra.mxu0 0.0
  %1244 = vmatprep.subr.mxu0 0.0
  %1245 = vmatpush1.msra.mxu0 0.0
  %1246 = vmatprep.subr.mxu0 0.0
  %1247 = vmatpush1.msra.mxu0 0.0
  %1248 = vmatprep.subr.mxu0 0.0
  %1249 = vmatpush1.msra.mxu0 0.0
  %1250 = vmatprep.subr.mxu0 0.0
  %1251 = vmatpush1.msra.mxu0 0.0
  %1252 = vmatprep.subr.mxu0 0.0
  %1253 = vmatpush1.msra.mxu0 0.0
  %1254 = vmatprep.subr.mxu0 0.0
  %1255 = vmatpush1.msra.mxu0 0.0
  %1256 = vmatprep.subr.mxu0 0.0
  %1257 = vmatpush1.msra.mxu0 0.0
  %1258 = vmatprep.mubr.f32.mxu0 0.0
  %1259 = vmatmul.mubr.f32.gmra.mrb[0].mxu0 %v1190
  %v1260 = vpop.f32.mrb[0].mxu0
  %v1261 = vadd.f32 0.0, %v1260
  %v1262 = vpop.f32.mrb[0].mxu0
  %1263 = vdwg.mxu0
  %v1265 = vsel %vm527, %v1048, 0
  %v1267 = vsel %vm531, %v680, 0
  %1269 = vmatprep.subr.mxu0 0.0
  %1270 = vmatpush1.msra.mxu0 %v1267
  %1271 = vmatprep.subr.mxu0 0.0
  %1272 = vmatpush1.msra.mxu0 0.0
  %1273 = vmatprep.subr.mxu0 0.0
  %1274 = vmatpush1.msra.mxu0 0.0
  %1275 = vmatprep.subr.mxu0 0.0
  %1276 = vmatpush1.msra.mxu0 0.0
  %1277 = vmatprep.subr.mxu0 0.0
  %1278 = vmatpush1.msra.mxu0 0.0
  %1279 = vmatprep.subr.mxu0 0.0
  %1280 = vmatpush1.msra.mxu0 0.0
  %1281 = vmatprep.subr.mxu0 0.0
  %1282 = vmatpush1.msra.mxu0 0.0
  %1283 = vmatprep.subr.mxu0 0.0
  %1284 = vmatpush1.msra.mxu0 0.0
  %1285 = vmatprep.subr.mxu0 0.0
  %1286 = vmatpush1.msra.mxu0 0.0
  %1287 = vmatprep.subr.mxu0 0.0
  %1288 = vmatpush1.msra.mxu0 0.0
  %1289 = vmatprep.subr.mxu0 0.0
  %1290 = vmatpush1.msra.mxu0 0.0
  %1291 = vmatprep.subr.mxu0 0.0
  %1292 = vmatpush1.msra.mxu0 0.0
  %1293 = vmatprep.subr.mxu0 0.0
  %1294 = vmatpush1.msra.mxu0 0.0
  %1295 = vmatprep.subr.mxu0 0.0
  %1296 = vmatpush1.msra.mxu0 0.0
  %1297 = vmatprep.subr.mxu0 0.0
  %1298 = vmatpush1.msra.mxu0 0.0
  %1299 = vmatprep.subr.mxu0 0.0
  %1300 = vmatpush1.msra.mxu0 0.0
  %1301 = vmatprep.subr.mxu0 0.0
  %1302 = vmatpush1.msra.mxu0 0.0
  %1303 = vmatprep.subr.mxu0 0.0
  %1304 = vmatpush1.msra.mxu0 0.0
  %1305 = vmatprep.subr.mxu0 0.0
  %1306 = vmatpush1.msra.mxu0 0.0
  %1307 = vmatprep.subr.mxu0 0.0
  %1308 = vmatpush1.msra.mxu0 0.0
  %1309 = vmatprep.subr.mxu0 0.0
  %1310 = vmatpush1.msra.mxu0 0.0
  %1311 = vmatprep.subr.mxu0 0.0
  %1312 = vmatpush1.msra.mxu0 0.0
  %1313 = vmatprep.subr.mxu0 0.0
  %1314 = vmatpush1.msra.mxu0 0.0
  %1315 = vmatprep.subr.mxu0 0.0
  %1316 = vmatpush1.msra.mxu0 0.0
  %1317 = vmatprep.subr.mxu0 0.0
  %1318 = vmatpush1.msra.mxu0 0.0
  %1319 = vmatprep.subr.mxu0 0.0
  %1320 = vmatpush1.msra.mxu0 0.0
  %1321 = vmatprep.subr.mxu0 0.0
  %1322 = vmatpush1.msra.mxu0 0.0
  %1323 = vmatprep.subr.mxu0 0.0
  %1324 = vmatpush1.msra.mxu0 0.0
  %1325 = vmatprep.subr.mxu0 0.0
  %1326 = vmatpush1.msra.mxu0 0.0
  %1327 = vmatprep.subr.mxu0 0.0
  %1328 = vmatpush1.msra.mxu0 0.0
  %1329 = vmatprep.subr.mxu0 0.0
  %1330 = vmatpush1.msra.mxu0 0.0
  %1331 = vmatprep.subr.mxu0 0.0
  %1332 = vmatpush1.msra.mxu0 0.0
  %1333 = vmatprep.mubr.f32.mxu0 0.0
  %1334 = vmatmul.mubr.f32.gmra.mrb[0].mxu0 %v1265
  %v1335 = vpop.f32.mrb[0].mxu0
  %v1336 = vadd.f32 %v1261, %v1335
  %v1337 = vpop.f32.mrb[0].mxu0
  %1338 = vdwg.mxu0
  %v1339 = vld [vmem:[%s3 + $0x30] sm:$0x1]
  %v1340 = vld [vmem:[%s3 + $0x38] sm:$0xff]
  %v1341 = vld [vmem:[%s3 + $0x40] sm:$0xff]
  %v1342 = vld [vmem:[%s3 + $0x32] sm:$0x1]
  %v1343 = vlaneseq
  %v1344 = vshrl.u32 %v1343, 7
  %v1345 = vsub.s32 0, %v1344
  %v1346 = vrot.slane %v1339, %v1345
  %v1348 = vsel %vm102, %v17, 0
  %1350 = vmatprep.subr.mxu0 0.0
  %1351 = vmatpush1.msra.mxu0 %v676
  %1352 = vmatprep.subr.mxu0 0.0
  %1353 = vmatpush1.msra.mxu0 0.0
  %1354 = vmatprep.subr.mxu0 0.0
  %1355 = vmatpush1.msra.mxu0 0.0
  %1356 = vmatprep.subr.mxu0 0.0
  %1357 = vmatpush1.msra.mxu0 0.0
  %1358 = vmatprep.subr.mxu0 0.0
  %1359 = vmatpush1.msra.mxu0 0.0
  %1360 = vmatprep.subr.mxu0 0.0
  %1361 = vmatpush1.msra.mxu0 0.0
  %1362 = vmatprep.subr.mxu0 0.0
  %1363 = vmatpush1.msra.mxu0 0.0
  %1364 = vmatprep.subr.mxu0 0.0
  %1365 = vmatpush1.msra.mxu0 0.0
  %1366 = vmatprep.subr.mxu0 0.0
  %1367 = vmatpush1.msra.mxu0 0.0
  %1368 = vmatprep.subr.mxu0 0.0
  %1369 = vmatpush1.msra.mxu0 0.0
  %1370 = vmatprep.subr.mxu0 0.0
  %1371 = vmatpush1.msra.mxu0 0.0
  %1372 = vmatprep.subr.mxu0 0.0
  %1373 = vmatpush1.msra.mxu0 0.0
  %1374 = vmatprep.subr.mxu0 0.0
  %1375 = vmatpush1.msra.mxu0 0.0
  %1376 = vmatprep.subr.mxu0 0.0
  %1377 = vmatpush1.msra.mxu0 0.0
  %1378 = vmatprep.subr.mxu0 0.0
  %1379 = vmatpush1.msra.mxu0 0.0
  %1380 = vmatprep.subr.mxu0 0.0
  %1381 = vmatpush1.msra.mxu0 0.0
  %1382 = vmatprep.subr.mxu0 0.0
  %1383 = vmatpush1.msra.mxu0 0.0
  %1384 = vmatprep.subr.mxu0 0.0
  %1385 = vmatpush1.msra.mxu0 0.0
  %1386 = vmatprep.subr.mxu0 0.0
  %1387 = vmatpush1.msra.mxu0 0.0
  %1388 = vmatprep.subr.mxu0 0.0
  %1389 = vmatpush1.msra.mxu0 0.0
  %1390 = vmatprep.subr.mxu0 0.0
  %1391 = vmatpush1.msra.mxu0 0.0
  %1392 = vmatprep.subr.mxu0 0.0
  %1393 = vmatpush1.msra.mxu0 0.0
  %1394 = vmatprep.subr.mxu0 0.0
  %1395 = vmatpush1.msra.mxu0 0.0
  %1396 = vmatprep.subr.mxu0 0.0
  %1397 = vmatpush1.msra.mxu0 0.0
  %1398 = vmatprep.subr.mxu0 0.0
  %1399 = vmatpush1.msra.mxu0 0.0
  %1400 = vmatprep.subr.mxu0 0.0
  %1401 = vmatpush1.msra.mxu0 0.0
  %1402 = vmatprep.subr.mxu0 0.0
  %1403 = vmatpush1.msra.mxu0 0.0
  %1404 = vmatprep.subr.mxu0 0.0
  %1405 = vmatpush1.msra.mxu0 0.0
  %1406 = vmatprep.subr.mxu0 0.0
  %1407 = vmatpush1.msra.mxu0 0.0
  %1408 = vmatprep.subr.mxu0 0.0
  %1409 = vmatpush1.msra.mxu0 0.0
  %1410 = vmatprep.subr.mxu0 0.0
  %1411 = vmatpush1.msra.mxu0 0.0
  %1412 = vmatprep.subr.mxu0 0.0
  %1413 = vmatpush1.msra.mxu0 0.0
  %1414 = vmatprep.mubr.f32.mxu0 0.0
  %1415 = vmatmul.mubr.f32.gmra.mrb[0].mxu0 %v1348
  %v1416 = vpop.f32.mrb[0].mxu0
  %v1417 = vadd.f32 %v1346, %v1416
  %v1418 = vpop.f32.mrb[0].mxu0
  %1419 = vdwg.mxu0
  %v1420 = vmax.f32 %v1417, 0.0
  %vm1421 = vcmask 130048
  %v1423 = vsel %vm1421, %v1420, 0
  %1425 = vmatprep.subr.mxu0 0.0
  %1426 = vmatpush1.msra.mxu0 %v1340
  %1427 = vmatprep.subr.mxu0 0.0
  %1428 = vmatpush1.msra.mxu0 %v1341
  %1429 = vmatprep.subr.mxu0 0.0
  %1430 = vmatpush1.msra.mxu0 0.0
  %1431 = vmatprep.subr.mxu0 0.0
  %1432 = vmatpush1.msra.mxu0 0.0
  %1433 = vmatprep.subr.mxu0 0.0
  %1434 = vmatpush1.msra.mxu0 0.0
  %1435 = vmatprep.subr.mxu0 0.0
  %1436 = vmatpush1.msra.mxu0 0.0
  %1437 = vmatprep.subr.mxu0 0.0
  %1438 = vmatpush1.msra.mxu0 0.0
  %1439 = vmatprep.subr.mxu0 0.0
  %1440 = vmatpush1.msra.mxu0 0.0
  %1441 = vmatprep.subr.mxu0 0.0
  %1442 = vmatpush1.msra.mxu0 0.0
  %1443 = vmatprep.subr.mxu0 0.0
  %1444 = vmatpush1.msra.mxu0 0.0
  %1445 = vmatprep.subr.mxu0 0.0
  %1446 = vmatpush1.msra.mxu0 0.0
  %1447 = vmatprep.subr.mxu0 0.0
  %1448 = vmatpush1.msra.mxu0 0.0
  %1449 = vmatprep.subr.mxu0 0.0
  %1450 = vmatpush1.msra.mxu0 0.0
  %1451 = vmatprep.subr.mxu0 0.0
  %1452 = vmatpush1.msra.mxu0 0.0
  %1453 = vmatprep.subr.mxu0 0.0
  %1454 = vmatpush1.msra.mxu0 0.0
  %1455 = vmatprep.subr.mxu0 0.0
  %1456 = vmatpush1.msra.mxu0 0.0
  %1457 = vmatprep.subr.mxu0 0.0
  %1458 = vmatpush1.msra.mxu0 0.0
  %1459 = vmatprep.subr.mxu0 0.0
  %1460 = vmatpush1.msra.mxu0 0.0
  %1461 = vmatprep.subr.mxu0 0.0
  %1462 = vmatpush1.msra.mxu0 0.0
  %1463 = vmatprep.subr.mxu0 0.0
  %1464 = vmatpush1.msra.mxu0 0.0
  %1465 = vmatprep.subr.mxu0 0.0
  %1466 = vmatpush1.msra.mxu0 0.0
  %1467 = vmatprep.subr.mxu0 0.0
  %1468 = vmatpush1.msra.mxu0 0.0
  %1469 = vmatprep.subr.mxu0 0.0
  %1470 = vmatpush1.msra.mxu0 0.0
  %1471 = vmatprep.subr.mxu0 0.0
  %1472 = vmatpush1.msra.mxu0 0.0
  %1473 = vmatprep.subr.mxu0 0.0
  %1474 = vmatpush1.msra.mxu0 0.0
  %1475 = vmatprep.subr.mxu0 0.0
  %1476 = vmatpush1.msra.mxu0 0.0
  %1477 = vmatprep.subr.mxu0 0.0
  %1478 = vmatpush1.msra.mxu0 0.0
  %1479 = vmatprep.subr.mxu0 0.0
  %1480 = vmatpush1.msra.mxu0 0.0
  %1481 = vmatprep.subr.mxu0 0.0
  %1482 = vmatpush1.msra.mxu0 0.0
  %1483 = vmatprep.subr.mxu0 0.0
  %1484 = vmatpush1.msra.mxu0 0.0
  %1485 = vmatprep.subr.mxu0 0.0
  %1486 = vmatpush1.msra.mxu0 0.0
  %1487 = vmatprep.subr.mxu0 0.0
  %1488 = vmatpush1.msra.mxu0 0.0
  %1489 = vmatprep.mubr.f32.mxu0 0.0
  %1490 = vmatmul.mubr.f32.gmra.mrb[0].mxu0 %v1423
  %v1491 = vpop.f32.mrb[0].mxu0
  %v1492 = vadd.f32 0.0, %v1491
  %v1493 = vpop.f32.mrb[0].mxu0
  %1494 = vdwg.mxu0
  %v1495 = vlaneseq
  %v1496 = vshrl.u32 %v1495, 7
  %v1497 = vsub.s32 0, %v1496
  %v1498 = vrot.slane %v1342, %v1497
  %1499 = vmatprep.subr.mxu0 0.0
  %1500 = vmatpush1.msra.mxu0 %v1492
  %1501 = vmatprep.subr.mxu0 0.0
  %1502 = vmatpush1.msra.mxu0 0.0
  %1503 = vmatprep.subr.mxu0 0.0
  %1504 = vmatpush1.msra.mxu0 0.0
  %1505 = vmatprep.subr.mxu0 0.0
  %1506 = vmatpush1.msra.mxu0 0.0
  %1507 = vmatprep.subr.mxu0 0.0
  %1508 = vmatpush1.msra.mxu0 0.0
  %1509 = vmatprep.subr.mxu0 0.0
  %1510 = vmatpush1.msra.mxu0 0.0
  %1511 = vmatprep.subr.mxu0 0.0
  %1512 = vmatpush1.msra.mxu0 0.0
  %1513 = vmatprep.subr.mxu0 0.0
  %1514 = vmatpush1.msra.mxu0 0.0
  %1515 = vmatprep.subr.mxu0 0.0
  %1516 = vmatpush1.msra.mxu0 0.0
  %1517 = vmatprep.subr.mxu0 0.0
  %1518 = vmatpush1.msra.mxu0 0.0
  %1519 = vmatprep.subr.mxu0 0.0
  %1520 = vmatpush1.msra.mxu0 0.0
  %1521 = vmatprep.subr.mxu0 0.0
  %1522 = vmatpush1.msra.mxu0 0.0
  %1523 = vmatprep.subr.mxu0 0.0
  %1524 = vmatpush1.msra.mxu0 0.0
  %1525 = vmatprep.subr.mxu0 0.0
  %1526 = vmatpush1.msra.mxu0 0.0
  %1527 = vmatprep.subr.mxu0 0.0
  %1528 = vmatpush1.msra.mxu0 0.0
  %1529 = vmatprep.subr.mxu0 0.0
  %1530 = vmatpush1.msra.mxu0 0.0
  %1531 = vmatprep.subr.mxu0 0.0
  %1532 = vmatpush1.msra.mxu0 0.0
  %1533 = vmatprep.subr.mxu0 0.0
  %1534 = vmatpush1.msra.mxu0 0.0
  %1535 = vmatprep.subr.mxu0 0.0
  %1536 = vmatpush1.msra.mxu0 0.0
  %1537 = vmatprep.subr.mxu0 0.0
  %1538 = vmatpush1.msra.mxu0 0.0
  %1539 = vmatprep.subr.mxu0 0.0
  %1540 = vmatpush1.msra.mxu0 0.0
  %1541 = vmatprep.subr.mxu0 0.0
  %1542 = vmatpush1.msra.mxu0 0.0
  %1543 = vmatprep.subr.mxu0 0.0
  %1544 = vmatpush1.msra.mxu0 0.0
  %1545 = vmatprep.subr.mxu0 0.0
  %1546 = vmatpush1.msra.mxu0 0.0
  %1547 = vmatprep.subr.mxu0 0.0
  %1548 = vmatpush1.msra.mxu0 0.0
  %1549 = vmatprep.subr.mxu0 0.0
  %1550 = vmatpush1.msra.mxu0 0.0
  %1551 = vmatprep.subr.mxu0 0.0
  %1552 = vmatpush1.msra.mxu0 0.0
  %1553 = vmatprep.subr.mxu0 0.0
  %1554 = vmatpush1.msra.mxu0 0.0
  %1555 = vmatprep.subr.mxu0 0.0
  %1556 = vmatpush1.msra.mxu0 0.0
  %1557 = vmatprep.subr.mxu0 0.0
  %1558 = vmatpush1.msra.mxu0 0.0
  %1559 = vmatprep.subr.mxu0 0.0
  %1560 = vmatpush1.msra.mxu0 0.0
  %1561 = vmatprep.subr.mxu0 0.0
  %1562 = vmatpush1.msra.mxu0 0.0
  %1563 = vmatprep.mubr.f32.mxu0 0.0
  %1564 = vmatmul.mubr.f32.gmra.mrb[0].mxu0 %v1348
  %v1565 = vpop.f32.mrb[0].mxu0
  %v1566 = vadd.f32 %v1498, %v1565
  %v1567 = vpop.f32.mrb[0].mxu0
  %1568 = vdwg.mxu0
  %v1569 = vld [vmem:[%s3 + $0x31] sm:$0x1]
  %v1570 = vld [vmem:[%s3 + $0x33] sm:$0x1]
  %v1571 = vlaneseq
  %v1572 = vshrl.u32 %v1571, 7
  %v1573 = vsub.s32 0, %v1572
  %v1574 = vrot.slane %v1569, %v1573
  %1575 = vmatprep.subr.mxu0 0.0
  %1576 = vmatpush1.msra.mxu0 %v1336
  %1577 = vmatprep.subr.mxu0 0.0
  %1578 = vmatpush1.msra.mxu0 0.0
  %1579 = vmatprep.subr.mxu0 0.0
  %1580 = vmatpush1.msra.mxu0 0.0
  %1581 = vmatprep.subr.mxu0 0.0
  %1582 = vmatpush1.msra.mxu0 0.0
  %1583 = vmatprep.subr.mxu0 0.0
  %1584 = vmatpush1.msra.mxu0 0.0
  %1585 = vmatprep.subr.mxu0 0.0
  %1586 = vmatpush1.msra.mxu0 0.0
  %1587 = vmatprep.subr.mxu0 0.0
  %1588 = vmatpush1.msra.mxu0 0.0
  %1589 = vmatprep.subr.mxu0 0.0
  %1590 = vmatpush1.msra.mxu0 0.0
  %1591 = vmatprep.subr.mxu0 0.0
  %1592 = vmatpush1.msra.mxu0 0.0
  %1593 = vmatprep.subr.mxu0 0.0
  %1594 = vmatpush1.msra.mxu0 0.0
  %1595 = vmatprep.subr.mxu0 0.0
  %1596 = vmatpush1.msra.mxu0 0.0
  %1597 = vmatprep.subr.mxu0 0.0
  %1598 = vmatpush1.msra.mxu0 0.0
  %1599 = vmatprep.subr.mxu0 0.0
  %1600 = vmatpush1.msra.mxu0 0.0
  %1601 = vmatprep.subr.mxu0 0.0
  %1602 = vmatpush1.msra.mxu0 0.0
  %1603 = vmatprep.subr.mxu0 0.0
  %1604 = vmatpush1.msra.mxu0 0.0
  %1605 = vmatprep.subr.mxu0 0.0
  %1606 = vmatpush1.msra.mxu0 0.0
  %1607 = vmatprep.subr.mxu0 0.0
  %1608 = vmatpush1.msra.mxu0 0.0
  %1609 = vmatprep.subr.mxu0 0.0
  %1610 = vmatpush1.msra.mxu0 0.0
  %1611 = vmatprep.subr.mxu0 0.0
  %1612 = vmatpush1.msra.mxu0 0.0
  %1613 = vmatprep.subr.mxu0 0.0
  %1614 = vmatpush1.msra.mxu0 0.0
  %1615 = vmatprep.subr.mxu0 0.0
  %1616 = vmatpush1.msra.mxu0 0.0
  %1617 = vmatprep.subr.mxu0 0.0
  %1618 = vmatpush1.msra.mxu0 0.0
  %1619 = vmatprep.subr.mxu0 0.0
  %1620 = vmatpush1.msra.mxu0 0.0
  %1621 = vmatprep.subr.mxu0 0.0
  %1622 = vmatpush1.msra.mxu0 0.0
  %1623 = vmatprep.subr.mxu0 0.0
  %1624 = vmatpush1.msra.mxu0 0.0
  %1625 = vmatprep.subr.mxu0 0.0
  %1626 = vmatpush1.msra.mxu0 0.0
  %1627 = vmatprep.subr.mxu0 0.0
  %1628 = vmatpush1.msra.mxu0 0.0
  %1629 = vmatprep.subr.mxu0 0.0
  %1630 = vmatpush1.msra.mxu0 0.0
  %1631 = vmatprep.subr.mxu0 0.0
  %1632 = vmatpush1.msra.mxu0 0.0
  %1633 = vmatprep.subr.mxu0 0.0
  %1634 = vmatpush1.msra.mxu0 0.0
  %1635 = vmatprep.subr.mxu0 0.0
  %1636 = vmatpush1.msra.mxu0 0.0
  %1637 = vmatprep.subr.mxu0 0.0
  %1638 = vmatpush1.msra.mxu0 0.0
  %1639 = vmatprep.mubr.f32.mxu0 0.0
  %1640 = vmatmul.mubr.f32.gmra.mrb[0].mxu0 %v1348
  %v1641 = vpop.f32.mrb[0].mxu0
  %v1642 = vadd.f32 %v1574, %v1641
  %v1643 = vpop.f32.mrb[0].mxu0
  %1644 = vdwg.mxu0
  %v1645 = vmax.f32 %v1642, 0.0
  %1648 = vrot.lane.b32.xlu0 %v1340, 126
  %v1649 = vpop.permute.xlu0 %1648
  %1650 = vrot.lane.b32.xlu0 %v1341, 126
  %v1651 = vpop.permute.xlu0 %1650
  %v1655 = vsel %vm1421, %v1645, 0
  %1657 = vmatprep.subr.mxu0 0.0
  %1658 = vmatpush1.msra.mxu0 %v1649
  %1659 = vmatprep.subr.mxu0 0.0
  %1660 = vmatpush1.msra.mxu0 %v1651
  %1661 = vmatprep.subr.mxu0 0.0
  %1662 = vmatpush1.msra.mxu0 0.0
  %1663 = vmatprep.subr.mxu0 0.0
  %1664 = vmatpush1.msra.mxu0 0.0
  %1665 = vmatprep.subr.mxu0 0.0
  %1666 = vmatpush1.msra.mxu0 0.0
  %1667 = vmatprep.subr.mxu0 0.0
  %1668 = vmatpush1.msra.mxu0 0.0
  %1669 = vmatprep.subr.mxu0 0.0
  %1670 = vmatpush1.msra.mxu0 0.0
  %1671 = vmatprep.subr.mxu0 0.0
  %1672 = vmatpush1.msra.mxu0 0.0
  %1673 = vmatprep.subr.mxu0 0.0
  %1674 = vmatpush1.msra.mxu0 0.0
  %1675 = vmatprep.subr.mxu0 0.0
  %1676 = vmatpush1.msra.mxu0 0.0
  %1677 = vmatprep.subr.mxu0 0.0
  %1678 = vmatpush1.msra.mxu0 0.0
  %1679 = vmatprep.subr.mxu0 0.0
  %1680 = vmatpush1.msra.mxu0 0.0
  %1681 = vmatprep.subr.mxu0 0.0
  %1682 = vmatpush1.msra.mxu0 0.0
  %1683 = vmatprep.subr.mxu0 0.0
  %1684 = vmatpush1.msra.mxu0 0.0
  %1685 = vmatprep.subr.mxu0 0.0
  %1686 = vmatpush1.msra.mxu0 0.0
  %1687 = vmatprep.subr.mxu0 0.0
  %1688 = vmatpush1.msra.mxu0 0.0
  %1689 = vmatprep.subr.mxu0 0.0
  %1690 = vmatpush1.msra.mxu0 0.0
  %1691 = vmatprep.subr.mxu0 0.0
  %1692 = vmatpush1.msra.mxu0 0.0
  %1693 = vmatprep.subr.mxu0 0.0
  %1694 = vmatpush1.msra.mxu0 0.0
  %1695 = vmatprep.subr.mxu0 0.0
  %1696 = vmatpush1.msra.mxu0 0.0
  %1697 = vmatprep.subr.mxu0 0.0
  %1698 = vmatpush1.msra.mxu0 0.0
  %1699 = vmatprep.subr.mxu0 0.0
  %1700 = vmatpush1.msra.mxu0 0.0
  %1701 = vmatprep.subr.mxu0 0.0
  %1702 = vmatpush1.msra.mxu0 0.0
  %1703 = vmatprep.subr.mxu0 0.0
  %1704 = vmatpush1.msra.mxu0 0.0
  %1705 = vmatprep.subr.mxu0 0.0
  %1706 = vmatpush1.msra.mxu0 0.0
  %1707 = vmatprep.subr.mxu0 0.0
  %1708 = vmatpush1.msra.mxu0 0.0
  %1709 = vmatprep.subr.mxu0 0.0
  %1710 = vmatpush1.msra.mxu0 0.0
  %1711 = vmatprep.subr.mxu0 0.0
  %1712 = vmatpush1.msra.mxu0 0.0
  %1713 = vmatprep.subr.mxu0 0.0
  %1714 = vmatpush1.msra.mxu0 0.0
  %1715 = vmatprep.subr.mxu0 0.0
  %1716 = vmatpush1.msra.mxu0 0.0
  %1717 = vmatprep.subr.mxu0 0.0
  %1718 = vmatpush1.msra.mxu0 0.0
  %1719 = vmatprep.subr.mxu0 0.0
  %1720 = vmatpush1.msra.mxu0 0.0
  %1721 = vmatprep.mubr.f32.mxu0 0.0
  %1722 = vmatmul.mubr.f32.gmra.mrb[0].mxu0 %v1655
  %v1723 = vpop.f32.mrb[0].mxu0
  %v1724 = vadd.f32 0.0, %v1723
  %v1725 = vpop.f32.mrb[0].mxu0
  %1726 = vdwg.mxu0
  %v1727 = vlaneseq
  %v1728 = vshrl.u32 %v1727, 7
  %v1729 = vsub.s32 0, %v1728
  %v1730 = vrot.slane %v1570, %v1729
  %1731 = vmatprep.subr.mxu0 0.0
  %1732 = vmatpush1.msra.mxu0 %v1724
  %1733 = vmatprep.subr.mxu0 0.0
  %1734 = vmatpush1.msra.mxu0 0.0
  %1735 = vmatprep.subr.mxu0 0.0
  %1736 = vmatpush1.msra.mxu0 0.0
  %1737 = vmatprep.subr.mxu0 0.0
  %1738 = vmatpush1.msra.mxu0 0.0
  %1739 = vmatprep.subr.mxu0 0.0
  %1740 = vmatpush1.msra.mxu0 0.0
  %1741 = vmatprep.subr.mxu0 0.0
  %1742 = vmatpush1.msra.mxu0 0.0
  %1743 = vmatprep.subr.mxu0 0.0
  %1744 = vmatpush1.msra.mxu0 0.0
  %1745 = vmatprep.subr.mxu0 0.0
  %1746 = vmatpush1.msra.mxu0 0.0
  %1747 = vmatprep.subr.mxu0 0.0
  %1748 = vmatpush1.msra.mxu0 0.0
  %1749 = vmatprep.subr.mxu0 0.0
  %1750 = vmatpush1.msra.mxu0 0.0
  %1751 = vmatprep.subr.mxu0 0.0
  %1752 = vmatpush1.msra.mxu0 0.0
  %1753 = vmatprep.subr.mxu0 0.0
  %1754 = vmatpush1.msra.mxu0 0.0
  %1755 = vmatprep.subr.mxu0 0.0
  %1756 = vmatpush1.msra.mxu0 0.0
  %1757 = vmatprep.subr.mxu0 0.0
  %1758 = vmatpush1.msra.mxu0 0.0
  %1759 = vmatprep.subr.mxu0 0.0
  %1760 = vmatpush1.msra.mxu0 0.0
  %1761 = vmatprep.subr.mxu0 0.0
  %1762 = vmatpush1.msra.mxu0 0.0
  %1763 = vmatprep.subr.mxu0 0.0
  %1764 = vmatpush1.msra.mxu0 0.0
  %1765 = vmatprep.subr.mxu0 0.0
  %1766 = vmatpush1.msra.mxu0 0.0
  %1767 = vmatprep.subr.mxu0 0.0
  %1768 = vmatpush1.msra.mxu0 0.0
  %1769 = vmatprep.subr.mxu0 0.0
  %1770 = vmatpush1.msra.mxu0 0.0
  %1771 = vmatprep.subr.mxu0 0.0
  %1772 = vmatpush1.msra.mxu0 0.0
  %1773 = vmatprep.subr.mxu0 0.0
  %1774 = vmatpush1.msra.mxu0 0.0
  %1775 = vmatprep.subr.mxu0 0.0
  %1776 = vmatpush1.msra.mxu0 0.0
  %1777 = vmatprep.subr.mxu0 0.0
  %1778 = vmatpush1.msra.mxu0 0.0
  %1779 = vmatprep.subr.mxu0 0.0
  %1780 = vmatpush1.msra.mxu0 0.0
  %1781 = vmatprep.subr.mxu0 0.0
  %1782 = vmatpush1.msra.mxu0 0.0
  %1783 = vmatprep.subr.mxu0 0.0
  %1784 = vmatpush1.msra.mxu0 0.0
  %1785 = vmatprep.subr.mxu0 0.0
  %1786 = vmatpush1.msra.mxu0 0.0
  %1787 = vmatprep.subr.mxu0 0.0
  %1788 = vmatpush1.msra.mxu0 0.0
  %1789 = vmatprep.subr.mxu0 0.0
  %1790 = vmatpush1.msra.mxu0 0.0
  %1791 = vmatprep.subr.mxu0 0.0
  %1792 = vmatpush1.msra.mxu0 0.0
  %1793 = vmatprep.subr.mxu0 0.0
  %1794 = vmatpush1.msra.mxu0 0.0
  %1795 = vmatprep.mubr.f32.mxu0 0.0
  %1796 = vmatmul.mubr.f32.gmra.mrb[0].mxu0 %v1348
  %v1797 = vpop.f32.mrb[0].mxu0
  %v1798 = vadd.f32 %v1730, %v1797
  %v1799 = vpop.f32.mrb[0].mxu0
  %1800 = vdwg.mxu0
  %vm1801 = vcmask 15360
  %v1802 = vsel %vm1801, %v1566, -inf
  %1803 = vmax.xlane.f32.xlu0 %v1802
  %v1804 = vpop.xlane.xlu0 %1803
  %v1805 = vsub.f32 %v1566, %v1804
  %v1806 = vmul.f32 %v1805, 1.442695
  %v1807 = vpow.pop %v1806
  %v1808 = vsel %vm1801, %v1807, 0.0
  %1809 = vadd.xlane.f32.xlu0 %v1808
  %v1810 = vpop.xlane.xlu0 %1809
  %v1811 = vlog2.pop %v1810
  %v1812 = vmul.f32 %v1811, 0.6931472
  %v1813 = vadd.f32 %v1804, %v1812
  %v1814 = vsub.f32 %v1566, %v1813
  %vm1815 = vcmp.gt.f32.partialorder %v1798, 0.0
  %v1816 = vmul.f32 %v1798, 0.01
  %v1817 = vsel %vm1815, %v1798, %v1816
  %1818 = vst.msk [vmem:[%s4] sm:$0xff] %vm1801, %v1814
  %1820 = vrot.lane.b32.xlu0 %v1817, 2
  %v1821 = vpop.permute.xlu0 %1820
  %vm1823 = vcmask 31760
  %1824 = vst.msk [vmem:[%s4] sm:$0xff] %vm1823, %v1821
  // Predicated region
  $region18: #{gcn_forward.1} parent=0 // pred_check
    _
  $region19: #{gcn_forward.1} parent=0 // pred_check_branch
    %1826 = sbr.rel (0) target = $region21
  $region20: #{gcn_forward.1} parent=0 // pred_region
    _
  $region21: #{gcn_forward.1} parent=0 // pred_fallthru
    _
  // Predicated region
  $region22: #{gcn_forward.1} parent=0 // pred_check
    _
  $region23: #{gcn_forward.1} parent=0 // pred_check_branch
    %1828 = sbr.rel (0) target = $region25
  $region24: #{gcn_forward.1} parent=0 // pred_region
    _
  $region25: #{gcn_forward.1} parent=0 // pred_fallthru
    _

</llo_original>
